<compile_context>
chip_gen: v5e
topology: v5e:2x2
jax: 0.10.0
libtpu: 0.0.40
codegen_flags: <defaults>
</compile_context>

<pallas_src>
import jax
import jax.numpy as jnp
from jax.experimental import pallas as pl
from jax.experimental.pallas import tpu as pltpu


def _round_up(x, m):
    return ((x + m - 1) // m) * m


def cls_head_kernel(x_ref, w_ref, b_ref, o_ref):
    # x_ref: (TB, C); w_ref: (C, N_pad) resident; b_ref: (1, N_pad) resident.
    # HIGHEST precision: negligible cost (kernel is HBM-bound), keeps f32
    # numerics faithful to the framework reference.
    acc = jnp.dot(x_ref[...], w_ref[...],
                  preferred_element_type=jnp.float32,
                  precision=jax.lax.Precision.HIGHEST)
    o_ref[...] = (acc + b_ref[...]).astype(o_ref.dtype)


def _choose_batch_tile(B, C, N_pad, in_dsize, out_dsize, align,
                       vmem_budget_bytes):
    """Largest sublane-aligned batch tile within the VMEM budget, capped so the
    grid has >= 2 steps when B is large enough (v7x megacore sharding)."""
    resident = C * N_pad * in_dsize + 8 * N_pad * 4       # weight + bias (1 buf)
    per_row = 2 * C * in_dsize + 2 * N_pad * out_dsize    # x + out (2 bufs each)
    avail = max(vmem_budget_bytes - resident, per_row * align)
    tb = max(align, (avail // per_row) // align * align)
    tb = min(tb, 1024)
    if B > align:
        # Keep at least 2 grid steps so the "parallel" axis can shard across
        # both v7x TensorCores.
        tb = min(tb, _round_up(pl.cdiv(B, 2), align))
    else:
        tb = align
    return max(align, min(tb, _round_up(B, align)))


def _build_call(*, B, C, N_pad, TB, out_dtype, vmem_limit, cost,
                single_buffer_resident):
    resident_kwargs = (
        dict(pipeline_mode=pl.Buffered(1)) if single_buffer_resident else {})
    return pl.pallas_call(
        cls_head_kernel,
        out_shape=jax.ShapeDtypeStruct((B, N_pad), out_dtype),
        grid=(pl.cdiv(B, TB),),
        in_specs=[
            # Activations: pipelined along the batch grid axis.
            pl.BlockSpec((TB, C), lambda i: (i, 0)),
            # Weight (C, N_pad): constant index_map -> resident, DMA'd once.
            pl.BlockSpec((C, N_pad), lambda i: (0, 0), **resident_kwargs),
            # Bias (1, N_pad): constant index_map -> resident, DMA'd once.
            pl.BlockSpec((1, N_pad), lambda i: (0, 0), **resident_kwargs),
        ],
        out_specs=pl.BlockSpec((TB, N_pad), lambda i: (i, 0)),
        compiler_params=pltpu.CompilerParams(
            dimension_semantics=("parallel",),
            vmem_limit_bytes=vmem_limit),
        cost_estimate=cost,
    )


def cls_head_forward(x, weight, bias, *, compute_dtype=None,
                     vmem_budget_bytes=24 << 20):
    """ClsHead forward: x.view(B, -1) @ weight.T + bias.

    x:      (B, ...) with prod(trailing dims) == in_channels.
    weight: (num_classes, in_channels), like nn.Linear.weight (NOT transposed).
    bias:   (num_classes,).
    compute_dtype: optionally stream x / w in a narrower dtype (e.g. bf16,
        halves the dominant HBM traffic) with f32 MXU accumulation;
        None keeps the input dtype.
    """
    B = x.shape[0]
    x_flat = x.reshape(B, -1)                      # x.view(x.size(0), -1)
    C = x_flat.shape[1]
    N = weight.shape[0]
    out_dtype = x.dtype

    if compute_dtype is not None:
        x_flat = x_flat.astype(compute_dtype)
        weight = weight.astype(compute_dtype)

    # Lane-dense output: pad class dim to a multiple of 128 (zero weight
    # columns + zero bias -> zero logits in the sliced-off columns).
    N_pad = _round_up(N, 128)
    # One-time XLA transpose to K-major RHS; negligible vs streaming x.
    w_t = weight.T
    b2d = bias.astype(jnp.float32).reshape(1, N)
    if N_pad != N:
        w_t = jnp.pad(w_t, ((0, 0), (0, N_pad - N)))
        b2d = jnp.pad(b2d, ((0, 0), (0, N_pad - N)))

    in_dsize = jnp.dtype(x_flat.dtype).itemsize
    out_dsize = jnp.dtype(out_dtype).itemsize
    # Sublane packing: 8 rows for 32-bit, 16 for 16-bit, 32 for 8-bit dtypes.
    align = {4: 8, 2: 16, 1: 32}.get(in_dsize, 8)

    TB = _choose_batch_tile(B, C, N_pad, in_dsize, out_dsize, align,
                            vmem_budget_bytes)

    # VMEM limit: actual footprint (fallback-safe: weight counted twice in
    # case double buffering is used) plus slack for compiler temporaries.
    vmem_bytes = (2 * TB * C * in_dsize            # x, double-buffered
                  + 2 * C * N_pad * in_dsize       # weight (<=2 buffers)
                  + 2 * 8 * N_pad * 4              # bias tile
                  + 2 * TB * N_pad * out_dsize)    # out, double-buffered
    vmem_limit = int(min(max(vmem_bytes + (4 << 20), 16 << 20), 64 << 20))

    cost = pl.CostEstimate(
        flops=2 * B * C * N,
        transcendentals=0,
        bytes_accessed=(B * C * in_dsize + C * N * in_dsize
                        + N * 4 + B * N * out_dsize))

    # TODO(synk): add a K (=C) grid axis with an f32 VMEM accumulator when the
    # resident (C, N_pad) weight no longer fits the VMEM budget (very large C).
    try:
        call = _build_call(B=B, C=C, N_pad=N_pad, TB=TB, out_dtype=out_dtype,
                           vmem_limit=vmem_limit, cost=cost,
                           single_buffer_resident=True)
        out = call(x_flat, w_t, b2d)
    except Exception:
        # Fallback: default (double-buffered) resident operands if Buffered(1)
        # is rejected by this jax/libtpu version.
        call = _build_call(B=B, C=C, N_pad=N_pad, TB=TB, out_dtype=out_dtype,
                           vmem_limit=vmem_limit, cost=cost,
                           single_buffer_resident=False)
        out = call(x_flat, w_t, b2d)

    # Strip class padding (batch needs no slicing: no B padding was added).
    return out[:, :N]


if __name__ == "__main__":
    in_channels = 256
    num_classes = 80

    key = jax.random.PRNGKey(0)
    k_x, k_w, k_x2 = jax.random.split(key, 3)

    # Deterministic parameter init mirroring _init_weights():
    #   weight ~ N(0, 0.01), bias = 0
    weight = 0.01 * jax.random.normal(
        k_w, (num_classes, in_channels), dtype=jnp.float32)
    bias = jnp.zeros((num_classes,), dtype=jnp.float32)

    # Input like a pooled feature map (B, C, 1, 1); forward flattens it.
    batch = 2
    x = jax.random.normal(k_x, (batch, in_channels, 1, 1), dtype=jnp.float32)

    cls_score = jax.block_until_ready(cls_head_forward(x, weight, bias))
    ref = x.reshape(batch, -1) @ weight.T + bias
    assert cls_score.shape == (batch, num_classes)
    assert jnp.allclose(cls_score, ref, atol=1e-5, rtol=1e-5)

    # Ragged batch (not a multiple of the 8-row tile, >1 grid step) exercises
    # the edge-block-masking path that replaced the wrapper-side x pad.
    batch2 = 10
    x2 = jax.random.normal(k_x2, (batch2, in_channels, 1, 1),
                           dtype=jnp.float32)
    cls_score2 = jax.block_until_ready(cls_head_forward(x2, weight, bias))
    ref2 = x2.reshape(batch2, -1) @ weight.T + bias
    assert cls_score2.shape == (batch2, num_classes)
    assert jnp.allclose(cls_score2, ref2, atol=1e-5, rtol=1e-5)

    print("KERNEL_OK")
</pallas_src>

<mosaic_0001>
module attributes {stable_mosaic.version = 11 : i64} {
  func.func @cls_head_kernel(%arg0: i32, %arg1: memref<8x256xf32, #tpu.memory_space<vmem>>, %arg2: memref<256x128xf32, #tpu.memory_space<vmem>>, %arg3: memref<1x128xf32, #tpu.memory_space<vmem>>, %arg4: memref<8x128xf32, #tpu.memory_space<vmem>>) attributes {dimension_semantics = [#tpu.dimension_semantics<parallel>], iteration_bounds = array<i64: 1>, scalar_prefetch = 0 : i64, scratch_operands = 0 : i64, tpu.core_type = #tpu.core_type<tc>, window_params = [{transform_indices = @transform_0, window_bounds = array<i64: 8, 256>}, {pipeline_mode = #tpu.pipeline_mode<synchronous>, transform_indices = @transform_1, window_bounds = array<i64: 256, 128>}, {pipeline_mode = #tpu.pipeline_mode<synchronous>, transform_indices = @transform_2, window_bounds = array<i64: 1, 128>}, {transform_indices = @transform_3, window_bounds = array<i64: 8, 128>}]} {
    %c0 = arith.constant 0 : index
    %c0_0 = arith.constant 0 : index
    %0 = vector.load %arg1[%c0, %c0_0] : memref<8x256xf32, #tpu.memory_space<vmem>>, vector<8x256xf32>
    %c0_1 = arith.constant 0 : index
    %c0_2 = arith.constant 0 : index
    %1 = vector.load %arg2[%c0_1, %c0_2] : memref<256x128xf32, #tpu.memory_space<vmem>>, vector<256x128xf32>
    %cst = arith.constant dense<0.000000e+00> : vector<8x128xf32>
    %2 = tpu.matmul %0, %1, %cst {dimension_numbers = #tpu.dot_dimension_numbers<[1], [0], [0], [1], [0, 0, 1, 1], [], []>, precision = #tpu.contract_precision<fp32>} : vector<8x256xf32>, vector<256x128xf32>, vector<8x128xf32> -> vector<8x128xf32>
    %c0_3 = arith.constant 0 : index
    %c0_4 = arith.constant 0 : index
    %3 = vector.load %arg3[%c0_3, %c0_4] : memref<1x128xf32, #tpu.memory_space<vmem>>, vector<1x128xf32>
    %4 = vector.broadcast %3 : vector<1x128xf32> to vector<8x128xf32>
    %5 = arith.addf %2, %4 : vector<8x128xf32>
    %c0_5 = arith.constant 0 : index
    %c0_6 = arith.constant 0 : index
    %6 = vector.load %arg4[%c0_5, %c0_6] : memref<8x128xf32, #tpu.memory_space<vmem>>, vector<8x128xf32>
    tpu.vector_store %arg4[%c0_5, %c0_6], %5 {strides = array<i32>} : memref<8x128xf32, #tpu.memory_space<vmem>>, vector<8x128xf32>,
    return
  }
  func.func @transform_0(%arg0: i32) -> (i32, i32) {
    %c0_i32 = arith.constant 0 : i32
    %c0_i32_0 = arith.constant 0 : i32
    return %arg0, %c0_i32 : i32, i32
  }
  func.func @transform_1(%arg0: i32) -> (i32, i32) {
    %c0_i32 = arith.constant 0 : i32
    %c0_i32_0 = arith.constant 0 : i32
    %c0_i32_1 = arith.constant 0 : i32
    return %c0_i32, %c0_i32_0 : i32, i32
  }
  func.func @transform_2(%arg0: i32) -> (i32, i32) {
    %c0_i32 = arith.constant 0 : i32
    %c0_i32_0 = arith.constant 0 : i32
    %c0_i32_1 = arith.constant 0 : i32
    return %c0_i32, %c0_i32_0 : i32, i32
  }
  func.func @transform_3(%arg0: i32) -> (i32, i32) {
    %c0_i32 = arith.constant 0 : i32
    %c0_i32_0 = arith.constant 0 : i32
    return %arg0, %c0_i32 : i32, i32
  }
}

module attributes {stable_mosaic.version = 11 : i64} {
  func.func @cls_head_kernel(%arg0: i32, %arg1: memref<8x256xf32, #tpu.memory_space<vmem>>, %arg2: memref<256x128xf32, #tpu.memory_space<vmem>>, %arg3: memref<1x128xf32, #tpu.memory_space<vmem>>, %arg4: memref<8x128xf32, #tpu.memory_space<vmem>>) attributes {dimension_semantics = [#tpu.dimension_semantics<parallel>], iteration_bounds = array<i64: 1>, scalar_prefetch = 0 : i64, scratch_operands = 0 : i64, tpu.core_type = #tpu.core_type<tc>, window_params = [{transform_indices = @transform_0, window_bounds = array<i64: 8, 256>}, {pipeline_mode = #tpu.pipeline_mode<synchronous>, transform_indices = @transform_1, window_bounds = array<i64: 256, 128>}, {pipeline_mode = #tpu.pipeline_mode<synchronous>, transform_indices = @transform_2, window_bounds = array<i64: 1, 128>}, {transform_indices = @transform_3, window_bounds = array<i64: 8, 128>}]} {
    %c0 = arith.constant 0 : index
    %c0_0 = arith.constant 0 : index
    %0 = vector.load %arg1[%c0, %c0_0] : memref<8x256xf32, #tpu.memory_space<vmem>>, vector<8x256xf32>
    %c0_1 = arith.constant 0 : index
    %c0_2 = arith.constant 0 : index
    %1 = vector.load %arg2[%c0_1, %c0_2] : memref<256x128xf32, #tpu.memory_space<vmem>>, vector<256x128xf32>
    %cst = arith.constant dense<0.000000e+00> : vector<8x128xf32>
    %2 = tpu.matmul %0, %1, %cst {dimension_numbers = #tpu.dot_dimension_numbers<[1], [0], [0], [1], [0, 0, 1, 1], [], []>, precision = #tpu.contract_precision<fp32>} : vector<8x256xf32>, vector<256x128xf32>, vector<8x128xf32> -> vector<8x128xf32>
    %c0_3 = arith.constant 0 : index
    %c0_4 = arith.constant 0 : index
    %3 = vector.load %arg3[%c0_3, %c0_4] : memref<1x128xf32, #tpu.memory_space<vmem>>, vector<1x128xf32>
    %4 = vector.broadcast %3 : vector<1x128xf32> to vector<8x128xf32>
    %5 = arith.addf %2, %4 : vector<8x128xf32>
    %c0_5 = arith.constant 0 : index
    %c0_6 = arith.constant 0 : index
    %6 = vector.load %arg4[%c0_5, %c0_6] : memref<8x128xf32, #tpu.memory_space<vmem>>, vector<8x128xf32>
    tpu.vector_store %arg4[%c0_5, %c0_6], %5 {strides = array<i32>} : memref<8x128xf32, #tpu.memory_space<vmem>>, vector<8x128xf32>,
    return
  }
  func.func @transform_0(%arg0: i32) -> (i32, i32) {
    %c0_i32 = arith.constant 0 : i32
    %c0_i32_0 = arith.constant 0 : i32
    return %arg0, %c0_i32 : i32, i32
  }
  func.func @transform_1(%arg0: i32) -> (i32, i32) {
    %c0_i32 = arith.constant 0 : i32
    %c0_i32_0 = arith.constant 0 : i32
    %c0_i32_1 = arith.constant 0 : i32
    return %c0_i32, %c0_i32_0 : i32, i32
  }
  func.func @transform_2(%arg0: i32) -> (i32, i32) {
    %c0_i32 = arith.constant 0 : i32
    %c0_i32_0 = arith.constant 0 : i32
    %c0_i32_1 = arith.constant 0 : i32
    return %c0_i32, %c0_i32_0 : i32, i32
  }
  func.func @transform_3(%arg0: i32) -> (i32, i32) {
    %c0_i32 = arith.constant 0 : i32
    %c0_i32_0 = arith.constant 0 : i32
    return %arg0, %c0_i32 : i32, i32
  }
}

</mosaic_0001>

<llo_original>
// kernel: tpu_custom_call.1
$region0: #{tpu_custom_call.1}
  #allocation0 [shape = 'u32[]', space=smem, size = 0x4, offset = 0x4, fixed_abs, tag = 'smem constant byte address 0x4 - core index']
  #allocation1 [shape = 'u32[72,128]{1,0:T(1,128)}', space=vmem, size = 0x9000, scoped, tag = 'internal scratch']
  %s0 = inlined_call_operand.hbm [shape: f32[2,256], index: 0, kind: input, shape index: {}]
  %s1 = inlined_call_operand.hbm [shape: f32[256,128], index: 1, kind: input, shape index: {}]
  %s2 = inlined_call_operand.vmem [shape: f32[1,128], index: 2, kind: input, shape index: {}]
  %s3 = inlined_call_operand.hbm [shape: f32[2,128], index: 3, kind: output, shape index: {}]
  %s4 = sld [smem:[#allocation0]]
  $region30: #{tpu_custom_call.1} parent=0
    _
  %s6 = ssub.s32 1, %s4
  %s7 = scalar_select 0, %s6, %s4
  $region1: #{tpu_custom_call.1} parent=0
    #allocation2 [shape = 'u8[8192]{0}', space=vmem, size = 0x2000, scoped, tag = 'input window, operand 0, single buffered']
    #allocation3 [shape = 's32[1]{0}', space=sflag, size = 0x4, scoped, tag = 'scoped memory for tpu_custom_call.1']
    #allocation4 [shape = 's32[1]{0}', space=sflag, size = 0x4, scoped, tag = 'scoped memory for tpu_custom_call.1']
    #allocation5 [shape = 'u8[131072]{0}', space=vmem, size = 0x20000, scoped, tag = 'input window, operand 1, single buffered']
    #allocation6 [shape = 's32[1]{0}', space=sflag, size = 0x4, scoped, tag = 'scoped memory for tpu_custom_call.1']
    #allocation7 [shape = 'u8[4096]{0}', space=vmem, size = 0x1000, scoped, tag = 'output window, operand 0, single buffered']
    %8 = vsyncpa [#allocation3], 0
    %9 = vsyncpa [#allocation6], 0
    %10 = vsyncpa [#allocation4], 0
    // Predicated region
    $region2: #{tpu_custom_call.1} parent=1 // pred_check
      _
    $region3: #{tpu_custom_call.1} parent=1 // pred_check_branch
      %12 = sbr.rel (0) target = $region5
    $region4: #{tpu_custom_call.1} parent=1 // pred_region
      %14 = vsyncadd [#allocation3], 192
      %s15 = sshll.u32 %s0, 4
      %s16 = int_to_ptr.hbm [resolvable:$true] %s15
      %s17 = sshll.u32 [#allocation2], 4
      %s18 = int_to_ptr.vmem [resolvable:$true] %s17
      %23 = dma.hbm_to_vmem [thread:$0]  %s16, 64, %s18, [#allocation3], 64, 64, 4
    $region5: #{tpu_custom_call.1} parent=1 // pred_fallthru
      _
    // Predicated region
    $region6: #{tpu_custom_call.1} parent=1 // pred_check
      _
    $region7: #{tpu_custom_call.1} parent=1 // pred_check_branch
      %25 = sbr.rel (0) target = $region9
    $region8: #{tpu_custom_call.1} parent=1 // pred_region
      %27 = vsyncadd [#allocation6], 0
      %s28 = sshll.u32 %s1, 4
      %s29 = int_to_ptr.hbm [resolvable:$true] %s28
      %s30 = sshll.u32 [#allocation5], 4
      %s31 = int_to_ptr.vmem [resolvable:$true] %s30
      %36 = dma.hbm_to_vmem [thread:$0]  %s29, 4096, %s31, [#allocation6], 128, 128, 8
    $region9: #{tpu_custom_call.1} parent=1 // pred_fallthru
      _
    // Predicated region
    $region10: #{tpu_custom_call.1} parent=1 // pred_check
      _
    $region11: #{tpu_custom_call.1} parent=1 // pred_check_branch
      %38 = sbr.rel (0) target = $region13
    $region12: #{tpu_custom_call.1} parent=1 // pred_region
      _
    $region13: #{tpu_custom_call.1} parent=1 // pred_fallthru
      _
    // Predicated region
    $region14: #{tpu_custom_call.1} parent=1 // pred_check
      _
    $region15: #{tpu_custom_call.1} parent=1 // pred_check_branch
      %40 = sbr.rel (0) target = $region17
    $region16: #{tpu_custom_call.1} parent=1 // pred_region
      %42 = dma.done [#allocation3], 256
    $region17: #{tpu_custom_call.1} parent=1 // pred_fallthru
      _
    // Predicated region
    $region18: #{tpu_custom_call.1} parent=1 // pred_check
      _
    $region19: #{tpu_custom_call.1} parent=1 // pred_check_branch
      %44 = sbr.rel (0) target = $region21
    $region20: #{tpu_custom_call.1} parent=1 // pred_region
      %46 = dma.done [#allocation6], 4096
    $region21: #{tpu_custom_call.1} parent=1 // pred_fallthru
      _
    %v47 = vld [vmem:[#allocation2] sm:$0xf]
    %v48 = vld [vmem:[#allocation2 + $0x4] sm:$0xf]
    %v49 = vld [vmem:[#allocation2 + $0x8] sm:$0xf]
    %v50 = vld [vmem:[#allocation2 + $0xc] sm:$0xf]
    %v51 = vld [vmem:[#allocation5] sm:$0xff]
    %v52 = vld [vmem:[#allocation5 + $0x8] sm:$0xff]
    %v53 = vld [vmem:[#allocation5 + $0x10] sm:$0xff]
    %v54 = vld [vmem:[#allocation5 + $0x18] sm:$0xff]
    %v55 = vld [vmem:[#allocation5 + $0x20] sm:$0xff]
    %v56 = vld [vmem:[#allocation5 + $0x28] sm:$0xff]
    %v57 = vld [vmem:[#allocation5 + $0x30] sm:$0xff]
    %v58 = vld [vmem:[#allocation5 + $0x38] sm:$0xff]
    %v59 = vld [vmem:[#allocation5 + $0x40] sm:$0xff]
    %v60 = vld [vmem:[#allocation5 + $0x48] sm:$0xff]
    %v61 = vld [vmem:[#allocation5 + $0x50] sm:$0xff]
    %v62 = vld [vmem:[#allocation5 + $0x58] sm:$0xff]
    %v63 = vld [vmem:[#allocation5 + $0x60] sm:$0xff]
    %v64 = vld [vmem:[#allocation5 + $0x68] sm:$0xff]
    %v65 = vld [vmem:[#allocation5 + $0x70] sm:$0xff]
    %v66 = vld [vmem:[#allocation5 + $0x78] sm:$0xff]
    %v67 = vld [vmem:[#allocation5 + $0x80] sm:$0xff]
    %v68 = vld [vmem:[#allocation5 + $0x88] sm:$0xff]
    %v69 = vld [vmem:[#allocation5 + $0x90] sm:$0xff]
    %v70 = vld [vmem:[#allocation5 + $0x98] sm:$0xff]
    %v71 = vld [vmem:[#allocation5 + $0xa0] sm:$0xff]
    %v72 = vld [vmem:[#allocation5 + $0xa8] sm:$0xff]
    %v73 = vld [vmem:[#allocation5 + $0xb0] sm:$0xff]
    %v74 = vld [vmem:[#allocation5 + $0xb8] sm:$0xff]
    %v75 = vld [vmem:[#allocation5 + $0xc0] sm:$0xff]
    %v76 = vld [vmem:[#allocation5 + $0xc8] sm:$0xff]
    %v77 = vld [vmem:[#allocation5 + $0xd0] sm:$0xff]
    %v78 = vld [vmem:[#allocation5 + $0xd8] sm:$0xff]
    %v79 = vld [vmem:[#allocation5 + $0xe0] sm:$0xff]
    %v80 = vld [vmem:[#allocation5 + $0xe8] sm:$0xff]
    %v81 = vld [vmem:[#allocation5 + $0xf0] sm:$0xff]
    %v82 = vld [vmem:[#allocation5 + $0xf8] sm:$0xff]
    %v83 = vld [vmem:[%s2] sm:$0x1]
    %v85 = vperm.slane %v83, 0
    %91 = vst [vmem:[#allocation1] ss:$4 sm:$0xff] %v47
    %s92 = scalar_lea.vmem [#allocation1], 1
    %93 = vst [vmem:[%s92] ss:$4 sm:$0xff] %v48
    %s94 = scalar_lea.vmem [#allocation1], 2
    %95 = vst [vmem:[%s94] ss:$4 sm:$0xff] %v49
    %s96 = scalar_lea.vmem [#allocation1], 3
    %97 = vst [vmem:[%s96] ss:$4 sm:$0xff] %v50
    %v98 = vld.sshfl [vmem:[#allocation1] sm:$0xff pattern:$0x73625140]
    %v99 = vld.sshfl [vmem:[#allocation1 + $0x8] sm:$0xff pattern:$0x73625140]
    %v102 = vand.u32 %v66, 4294901760
    %103 = vmatpush.msra.mxu0 %v102
    %v104 = vand.u32 %v65, 4294901760
    %105 = vmatpush.msra.mxu0 %v104
    %v106 = vand.u32 %v64, 4294901760
    %107 = vmatpush.msra.mxu0 %v106
    %v108 = vand.u32 %v63, 4294901760
    %109 = vmatpush.msra.mxu0 %v108
    %v110 = vand.u32 %v62, 4294901760
    %111 = vmatpush.msra.mxu0 %v110
    %v112 = vand.u32 %v61, 4294901760
    %113 = vmatpush.msra.mxu0 %v112
    %v114 = vand.u32 %v60, 4294901760
    %115 = vmatpush.msra.mxu0 %v114
    %v116 = vand.u32 %v59, 4294901760
    %117 = vmatpush.msra.mxu0 %v116
    %v118 = vand.u32 %v58, 4294901760
    %119 = vmatpush.msra.mxu0 %v118
    %v120 = vand.u32 %v57, 4294901760
    %121 = vmatpush.msra.mxu0 %v120
    %v122 = vand.u32 %v56, 4294901760
    %123 = vmatpush.msra.mxu0 %v122
    %v124 = vand.u32 %v55, 4294901760
    %125 = vmatpush.msra.mxu0 %v124
    %v126 = vand.u32 %v54, 4294901760
    %127 = vmatpush.msra.mxu0 %v126
    %v128 = vand.u32 %v53, 4294901760
    %129 = vmatpush.msra.mxu0 %v128
    %v130 = vand.u32 %v52, 4294901760
    %131 = vmatpush.msra.mxu0 %v130
    %v132 = vand.u32 %v51, 4294901760
    %133 = vmatpush.msra.mxu0 %v132
    %v134 = vand.u32 %v98, 4294901760
    %v135 = vsub.f32 %v98, %v134
    %v136 = vand.u32 %v135, 4294901760
    %v137 = vsub.f32 %v135, %v136
    %v138 = vand.u32 %v137, 4294901760
    %139 = vmatmul.f32.gmra.mxu0 %v138
    %v140 = vpop.f32.mrf.mxu0
    %v141 = vadd.f32 %v85, %v140
    %142 = vdwg.mxu0
    %v143 = vand.u32 %v66, 4294901760
    %v144 = vsub.f32 %v66, %v143
    %v145 = vand.u32 %v144, 4294901760
    %v146 = vsub.f32 %v144, %v145
    %v147 = vand.u32 %v146, 4294901760
    %148 = vmatpush.msra.mxu0 %v147
    %v149 = vand.u32 %v65, 4294901760
    %v150 = vsub.f32 %v65, %v149
    %v151 = vand.u32 %v150, 4294901760
    %v152 = vsub.f32 %v150, %v151
    %v153 = vand.u32 %v152, 4294901760
    %154 = vmatpush.msra.mxu0 %v153
    %v155 = vand.u32 %v64, 4294901760
    %v156 = vsub.f32 %v64, %v155
    %v157 = vand.u32 %v156, 4294901760
    %v158 = vsub.f32 %v156, %v157
    %v159 = vand.u32 %v158, 4294901760
    %160 = vmatpush.msra.mxu0 %v159
    %v161 = vand.u32 %v63, 4294901760
    %v162 = vsub.f32 %v63, %v161
    %v163 = vand.u32 %v162, 4294901760
    %v164 = vsub.f32 %v162, %v163
    %v165 = vand.u32 %v164, 4294901760
    %166 = vmatpush.msra.mxu0 %v165
    %v167 = vand.u32 %v62, 4294901760
    %v168 = vsub.f32 %v62, %v167
    %v169 = vand.u32 %v168, 4294901760
    %v170 = vsub.f32 %v168, %v169
    %v171 = vand.u32 %v170, 4294901760
    %172 = vmatpush.msra.mxu0 %v171
    %v173 = vand.u32 %v61, 4294901760
    %v174 = vsub.f32 %v61, %v173
    %v175 = vand.u32 %v174, 4294901760
    %v176 = vsub.f32 %v174, %v175
    %v177 = vand.u32 %v176, 4294901760
    %178 = vmatpush.msra.mxu0 %v177
    %v179 = vand.u32 %v60, 4294901760
    %v180 = vsub.f32 %v60, %v179
    %v181 = vand.u32 %v180, 4294901760
    %v182 = vsub.f32 %v180, %v181
    %v183 = vand.u32 %v182, 4294901760
    %184 = vmatpush.msra.mxu0 %v183
    %v185 = vand.u32 %v59, 4294901760
    %v186 = vsub.f32 %v59, %v185
    %v187 = vand.u32 %v186, 4294901760
    %v188 = vsub.f32 %v186, %v187
    %v189 = vand.u32 %v188, 4294901760
    %190 = vmatpush.msra.mxu0 %v189
    %v191 = vand.u32 %v58, 4294901760
    %v192 = vsub.f32 %v58, %v191
    %v193 = vand.u32 %v192, 4294901760
    %v194 = vsub.f32 %v192, %v193
    %v195 = vand.u32 %v194, 4294901760
    %196 = vmatpush.msra.mxu0 %v195
    %v197 = vand.u32 %v57, 4294901760
    %v198 = vsub.f32 %v57, %v197
    %v199 = vand.u32 %v198, 4294901760
    %v200 = vsub.f32 %v198, %v199
    %v201 = vand.u32 %v200, 4294901760
    %202 = vmatpush.msra.mxu0 %v201
    %v203 = vand.u32 %v56, 4294901760
    %v204 = vsub.f32 %v56, %v203
    %v205 = vand.u32 %v204, 4294901760
    %v206 = vsub.f32 %v204, %v205
    %v207 = vand.u32 %v206, 4294901760
    %208 = vmatpush.msra.mxu0 %v207
    %v209 = vand.u32 %v55, 4294901760
    %v210 = vsub.f32 %v55, %v209
    %v211 = vand.u32 %v210, 4294901760
    %v212 = vsub.f32 %v210, %v211
    %v213 = vand.u32 %v212, 4294901760
    %214 = vmatpush.msra.mxu0 %v213
    %v215 = vand.u32 %v54, 4294901760
    %v216 = vsub.f32 %v54, %v215
    %v217 = vand.u32 %v216, 4294901760
    %v218 = vsub.f32 %v216, %v217
    %v219 = vand.u32 %v218, 4294901760
    %220 = vmatpush.msra.mxu0 %v219
    %v221 = vand.u32 %v53, 4294901760
    %v222 = vsub.f32 %v53, %v221
    %v223 = vand.u32 %v222, 4294901760
    %v224 = vsub.f32 %v222, %v223
    %v225 = vand.u32 %v224, 4294901760
    %226 = vmatpush.msra.mxu0 %v225
    %v227 = vand.u32 %v52, 4294901760
    %v228 = vsub.f32 %v52, %v227
    %v229 = vand.u32 %v228, 4294901760
    %v230 = vsub.f32 %v228, %v229
    %v231 = vand.u32 %v230, 4294901760
    %232 = vmatpush.msra.mxu0 %v231
    %v233 = vand.u32 %v51, 4294901760
    %v234 = vsub.f32 %v51, %v233
    %v235 = vand.u32 %v234, 4294901760
    %v236 = vsub.f32 %v234, %v235
    %v237 = vand.u32 %v236, 4294901760
    %238 = vmatpush.msra.mxu0 %v237
    %v239 = vand.u32 %v98, 4294901760
    %240 = vmatmul.f32.gmra.mxu0 %v239
    %v241 = vpop.f32.mrf.mxu0
    %v242 = vadd.f32 %v141, %v241
    %243 = vdwg.mxu0
    %v244 = vand.u32 %v66, 4294901760
    %v245 = vsub.f32 %v66, %v244
    %246 = vmatpush.msra.mxu0 %v245
    %v247 = vand.u32 %v65, 4294901760
    %v248 = vsub.f32 %v65, %v247
    %249 = vmatpush.msra.mxu0 %v248
    %v250 = vand.u32 %v64, 4294901760
    %v251 = vsub.f32 %v64, %v250
    %252 = vmatpush.msra.mxu0 %v251
    %v253 = vand.u32 %v63, 4294901760
    %v254 = vsub.f32 %v63, %v253
    %255 = vmatpush.msra.mxu0 %v254
    %v256 = vand.u32 %v62, 4294901760
    %v257 = vsub.f32 %v62, %v256
    %258 = vmatpush.msra.mxu0 %v257
    %v259 = vand.u32 %v61, 4294901760
    %v260 = vsub.f32 %v61, %v259
    %261 = vmatpush.msra.mxu0 %v260
    %v262 = vand.u32 %v60, 4294901760
    %v263 = vsub.f32 %v60, %v262
    %264 = vmatpush.msra.mxu0 %v263
    %v265 = vand.u32 %v59, 4294901760
    %v266 = vsub.f32 %v59, %v265
    %267 = vmatpush.msra.mxu0 %v266
    %v268 = vand.u32 %v58, 4294901760
    %v269 = vsub.f32 %v58, %v268
    %270 = vmatpush.msra.mxu0 %v269
    %v271 = vand.u32 %v57, 4294901760
    %v272 = vsub.f32 %v57, %v271
    %273 = vmatpush.msra.mxu0 %v272
    %v274 = vand.u32 %v56, 4294901760
    %v275 = vsub.f32 %v56, %v274
    %276 = vmatpush.msra.mxu0 %v275
    %v277 = vand.u32 %v55, 4294901760
    %v278 = vsub.f32 %v55, %v277
    %279 = vmatpush.msra.mxu0 %v278
    %v280 = vand.u32 %v54, 4294901760
    %v281 = vsub.f32 %v54, %v280
    %282 = vmatpush.msra.mxu0 %v281
    %v283 = vand.u32 %v53, 4294901760
    %v284 = vsub.f32 %v53, %v283
    %285 = vmatpush.msra.mxu0 %v284
    %v286 = vand.u32 %v52, 4294901760
    %v287 = vsub.f32 %v52, %v286
    %288 = vmatpush.msra.mxu0 %v287
    %v289 = vand.u32 %v51, 4294901760
    %v290 = vsub.f32 %v51, %v289
    %291 = vmatpush.msra.mxu0 %v290
    %v292 = vand.u32 %v98, 4294901760
    %v293 = vsub.f32 %v98, %v292
    %294 = vmatmul.f32.gmra.mxu0 %v293
    %v295 = vpop.f32.mrf.mxu0
    %v296 = vadd.f32 %v242, %v295
    %297 = vdwg.mxu0
    %v298 = vand.u32 %v66, 4294901760
    %299 = vmatpush.msra.mxu0 %v298
    %v300 = vand.u32 %v65, 4294901760
    %301 = vmatpush.msra.mxu0 %v300
    %v302 = vand.u32 %v64, 4294901760
    %303 = vmatpush.msra.mxu0 %v302
    %v304 = vand.u32 %v63, 4294901760
    %305 = vmatpush.msra.mxu0 %v304
    %v306 = vand.u32 %v62, 4294901760
    %307 = vmatpush.msra.mxu0 %v306
    %v308 = vand.u32 %v61, 4294901760
    %309 = vmatpush.msra.mxu0 %v308
    %v310 = vand.u32 %v60, 4294901760
    %311 = vmatpush.msra.mxu0 %v310
    %v312 = vand.u32 %v59, 4294901760
    %313 = vmatpush.msra.mxu0 %v312
    %v314 = vand.u32 %v58, 4294901760
    %315 = vmatpush.msra.mxu0 %v314
    %v316 = vand.u32 %v57, 4294901760
    %317 = vmatpush.msra.mxu0 %v316
    %v318 = vand.u32 %v56, 4294901760
    %319 = vmatpush.msra.mxu0 %v318
    %v320 = vand.u32 %v55, 4294901760
    %321 = vmatpush.msra.mxu0 %v320
    %v322 = vand.u32 %v54, 4294901760
    %323 = vmatpush.msra.mxu0 %v322
    %v324 = vand.u32 %v53, 4294901760
    %325 = vmatpush.msra.mxu0 %v324
    %v326 = vand.u32 %v52, 4294901760
    %327 = vmatpush.msra.mxu0 %v326
    %v328 = vand.u32 %v51, 4294901760
    %329 = vmatpush.msra.mxu0 %v328
    %v330 = vand.u32 %v98, 4294901760
    %v331 = vsub.f32 %v98, %v330
    %v332 = vand.u32 %v331, 4294901760
    %333 = vmatmul.f32.gmra.mxu0 %v332
    %v334 = vpop.f32.mrf.mxu0
    %v335 = vadd.f32 %v296, %v334
    %336 = vdwg.mxu0
    %v337 = vand.u32 %v66, 4294901760
    %v338 = vsub.f32 %v66, %v337
    %v339 = vand.u32 %v338, 4294901760
    %340 = vmatpush.msra.mxu0 %v339
    %v341 = vand.u32 %v65, 4294901760
    %v342 = vsub.f32 %v65, %v341
    %v343 = vand.u32 %v342, 4294901760
    %344 = vmatpush.msra.mxu0 %v343
    %v345 = vand.u32 %v64, 4294901760
    %v346 = vsub.f32 %v64, %v345
    %v347 = vand.u32 %v346, 4294901760
    %348 = vmatpush.msra.mxu0 %v347
    %v349 = vand.u32 %v63, 4294901760
    %v350 = vsub.f32 %v63, %v349
    %v351 = vand.u32 %v350, 4294901760
    %352 = vmatpush.msra.mxu0 %v351
    %v353 = vand.u32 %v62, 4294901760
    %v354 = vsub.f32 %v62, %v353
    %v355 = vand.u32 %v354, 4294901760
    %356 = vmatpush.msra.mxu0 %v355
    %v357 = vand.u32 %v61, 4294901760
    %v358 = vsub.f32 %v61, %v357
    %v359 = vand.u32 %v358, 4294901760
    %360 = vmatpush.msra.mxu0 %v359
    %v361 = vand.u32 %v60, 4294901760
    %v362 = vsub.f32 %v60, %v361
    %v363 = vand.u32 %v362, 4294901760
    %364 = vmatpush.msra.mxu0 %v363
    %v365 = vand.u32 %v59, 4294901760
    %v366 = vsub.f32 %v59, %v365
    %v367 = vand.u32 %v366, 4294901760
    %368 = vmatpush.msra.mxu0 %v367
    %v369 = vand.u32 %v58, 4294901760
    %v370 = vsub.f32 %v58, %v369
    %v371 = vand.u32 %v370, 4294901760
    %372 = vmatpush.msra.mxu0 %v371
    %v373 = vand.u32 %v57, 4294901760
    %v374 = vsub.f32 %v57, %v373
    %v375 = vand.u32 %v374, 4294901760
    %376 = vmatpush.msra.mxu0 %v375
    %v377 = vand.u32 %v56, 4294901760
    %v378 = vsub.f32 %v56, %v377
    %v379 = vand.u32 %v378, 4294901760
    %380 = vmatpush.msra.mxu0 %v379
    %v381 = vand.u32 %v55, 4294901760
    %v382 = vsub.f32 %v55, %v381
    %v383 = vand.u32 %v382, 4294901760
    %384 = vmatpush.msra.mxu0 %v383
    %v385 = vand.u32 %v54, 4294901760
    %v386 = vsub.f32 %v54, %v385
    %v387 = vand.u32 %v386, 4294901760
    %388 = vmatpush.msra.mxu0 %v387
    %v389 = vand.u32 %v53, 4294901760
    %v390 = vsub.f32 %v53, %v389
    %v391 = vand.u32 %v390, 4294901760
    %392 = vmatpush.msra.mxu0 %v391
    %v393 = vand.u32 %v52, 4294901760
    %v394 = vsub.f32 %v52, %v393
    %v395 = vand.u32 %v394, 4294901760
    %396 = vmatpush.msra.mxu0 %v395
    %v397 = vand.u32 %v51, 4294901760
    %v398 = vsub.f32 %v51, %v397
    %v399 = vand.u32 %v398, 4294901760
    %400 = vmatpush.msra.mxu0 %v399
    %v401 = vand.u32 %v98, 4294901760
    %402 = vmatmul.f32.gmra.mxu0 %v401
    %v403 = vpop.f32.mrf.mxu0
    %v404 = vadd.f32 %v335, %v403
    %405 = vdwg.mxu0
    %v406 = vand.u32 %v66, 4294901760
    %407 = vmatpush.msra.mxu0 %v406
    %v408 = vand.u32 %v65, 4294901760
    %409 = vmatpush.msra.mxu0 %v408
    %v410 = vand.u32 %v64, 4294901760
    %411 = vmatpush.msra.mxu0 %v410
    %v412 = vand.u32 %v63, 4294901760
    %413 = vmatpush.msra.mxu0 %v412
    %v414 = vand.u32 %v62, 4294901760
    %415 = vmatpush.msra.mxu0 %v414
    %v416 = vand.u32 %v61, 4294901760
    %417 = vmatpush.msra.mxu0 %v416
    %v418 = vand.u32 %v60, 4294901760
    %419 = vmatpush.msra.mxu0 %v418
    %v420 = vand.u32 %v59, 4294901760
    %421 = vmatpush.msra.mxu0 %v420
    %v422 = vand.u32 %v58, 4294901760
    %423 = vmatpush.msra.mxu0 %v422
    %v424 = vand.u32 %v57, 4294901760
    %425 = vmatpush.msra.mxu0 %v424
    %v426 = vand.u32 %v56, 4294901760
    %427 = vmatpush.msra.mxu0 %v426
    %v428 = vand.u32 %v55, 4294901760
    %429 = vmatpush.msra.mxu0 %v428
    %v430 = vand.u32 %v54, 4294901760
    %431 = vmatpush.msra.mxu0 %v430
    %v432 = vand.u32 %v53, 4294901760
    %433 = vmatpush.msra.mxu0 %v432
    %v434 = vand.u32 %v52, 4294901760
    %435 = vmatpush.msra.mxu0 %v434
    %v436 = vand.u32 %v51, 4294901760
    %437 = vmatpush.msra.mxu0 %v436
    %v438 = vand.u32 %v98, 4294901760
    %439 = vmatmul.f32.gmra.mxu0 %v438
    %v440 = vpop.f32.mrf.mxu0
    %v441 = vadd.f32 %v404, %v440
    %442 = vdwg.mxu0
    %v443 = vand.u32 %v82, 4294901760
    %444 = vmatpush.msra.mxu0 %v443
    %v445 = vand.u32 %v81, 4294901760
    %446 = vmatpush.msra.mxu0 %v445
    %v447 = vand.u32 %v80, 4294901760
    %448 = vmatpush.msra.mxu0 %v447
    %v449 = vand.u32 %v79, 4294901760
    %450 = vmatpush.msra.mxu0 %v449
    %v451 = vand.u32 %v78, 4294901760
    %452 = vmatpush.msra.mxu0 %v451
    %v453 = vand.u32 %v77, 4294901760
    %454 = vmatpush.msra.mxu0 %v453
    %v455 = vand.u32 %v76, 4294901760
    %456 = vmatpush.msra.mxu0 %v455
    %v457 = vand.u32 %v75, 4294901760
    %458 = vmatpush.msra.mxu0 %v457
    %v459 = vand.u32 %v74, 4294901760
    %460 = vmatpush.msra.mxu0 %v459
    %v461 = vand.u32 %v73, 4294901760
    %462 = vmatpush.msra.mxu0 %v461
    %v463 = vand.u32 %v72, 4294901760
    %464 = vmatpush.msra.mxu0 %v463
    %v465 = vand.u32 %v71, 4294901760
    %466 = vmatpush.msra.mxu0 %v465
    %v467 = vand.u32 %v70, 4294901760
    %468 = vmatpush.msra.mxu0 %v467
    %v469 = vand.u32 %v69, 4294901760
    %470 = vmatpush.msra.mxu0 %v469
    %v471 = vand.u32 %v68, 4294901760
    %472 = vmatpush.msra.mxu0 %v471
    %v473 = vand.u32 %v67, 4294901760
    %474 = vmatpush.msra.mxu0 %v473
    %v475 = vand.u32 %v99, 4294901760
    %v476 = vsub.f32 %v99, %v475
    %v477 = vand.u32 %v476, 4294901760
    %v478 = vsub.f32 %v476, %v477
    %v479 = vand.u32 %v478, 4294901760
    %480 = vmatmul.f32.gmra.mxu0 %v479
    %v481 = vpop.f32.mrf.mxu0
    %v482 = vadd.f32 %v441, %v481
    %483 = vdwg.mxu0
    %v484 = vand.u32 %v82, 4294901760
    %v485 = vsub.f32 %v82, %v484
    %v486 = vand.u32 %v485, 4294901760
    %v487 = vsub.f32 %v485, %v486
    %v488 = vand.u32 %v487, 4294901760
    %489 = vmatpush.msra.mxu0 %v488
    %v490 = vand.u32 %v81, 4294901760
    %v491 = vsub.f32 %v81, %v490
    %v492 = vand.u32 %v491, 4294901760
    %v493 = vsub.f32 %v491, %v492
    %v494 = vand.u32 %v493, 4294901760
    %495 = vmatpush.msra.mxu0 %v494
    %v496 = vand.u32 %v80, 4294901760
    %v497 = vsub.f32 %v80, %v496
    %v498 = vand.u32 %v497, 4294901760
    %v499 = vsub.f32 %v497, %v498
    %v500 = vand.u32 %v499, 4294901760
    %501 = vmatpush.msra.mxu0 %v500
    %v502 = vand.u32 %v79, 4294901760
    %v503 = vsub.f32 %v79, %v502
    %v504 = vand.u32 %v503, 4294901760
    %v505 = vsub.f32 %v503, %v504
    %v506 = vand.u32 %v505, 4294901760
    %507 = vmatpush.msra.mxu0 %v506
    %v508 = vand.u32 %v78, 4294901760
    %v509 = vsub.f32 %v78, %v508
    %v510 = vand.u32 %v509, 4294901760
    %v511 = vsub.f32 %v509, %v510
    %v512 = vand.u32 %v511, 4294901760
    %513 = vmatpush.msra.mxu0 %v512
    %v514 = vand.u32 %v77, 4294901760
    %v515 = vsub.f32 %v77, %v514
    %v516 = vand.u32 %v515, 4294901760
    %v517 = vsub.f32 %v515, %v516
    %v518 = vand.u32 %v517, 4294901760
    %519 = vmatpush.msra.mxu0 %v518
    %v520 = vand.u32 %v76, 4294901760
    %v521 = vsub.f32 %v76, %v520
    %v522 = vand.u32 %v521, 4294901760
    %v523 = vsub.f32 %v521, %v522
    %v524 = vand.u32 %v523, 4294901760
    %525 = vmatpush.msra.mxu0 %v524
    %v526 = vand.u32 %v75, 4294901760
    %v527 = vsub.f32 %v75, %v526
    %v528 = vand.u32 %v527, 4294901760
    %v529 = vsub.f32 %v527, %v528
    %v530 = vand.u32 %v529, 4294901760
    %531 = vmatpush.msra.mxu0 %v530
    %v532 = vand.u32 %v74, 4294901760
    %v533 = vsub.f32 %v74, %v532
    %v534 = vand.u32 %v533, 4294901760
    %v535 = vsub.f32 %v533, %v534
    %v536 = vand.u32 %v535, 4294901760
    %537 = vmatpush.msra.mxu0 %v536
    %v538 = vand.u32 %v73, 4294901760
    %v539 = vsub.f32 %v73, %v538
    %v540 = vand.u32 %v539, 4294901760
    %v541 = vsub.f32 %v539, %v540
    %v542 = vand.u32 %v541, 4294901760
    %543 = vmatpush.msra.mxu0 %v542
    %v544 = vand.u32 %v72, 4294901760
    %v545 = vsub.f32 %v72, %v544
    %v546 = vand.u32 %v545, 4294901760
    %v547 = vsub.f32 %v545, %v546
    %v548 = vand.u32 %v547, 4294901760
    %549 = vmatpush.msra.mxu0 %v548
    %v550 = vand.u32 %v71, 4294901760
    %v551 = vsub.f32 %v71, %v550
    %v552 = vand.u32 %v551, 4294901760
    %v553 = vsub.f32 %v551, %v552
    %v554 = vand.u32 %v553, 4294901760
    %555 = vmatpush.msra.mxu0 %v554
    %v556 = vand.u32 %v70, 4294901760
    %v557 = vsub.f32 %v70, %v556
    %v558 = vand.u32 %v557, 4294901760
    %v559 = vsub.f32 %v557, %v558
    %v560 = vand.u32 %v559, 4294901760
    %561 = vmatpush.msra.mxu0 %v560
    %v562 = vand.u32 %v69, 4294901760
    %v563 = vsub.f32 %v69, %v562
    %v564 = vand.u32 %v563, 4294901760
    %v565 = vsub.f32 %v563, %v564
    %v566 = vand.u32 %v565, 4294901760
    %567 = vmatpush.msra.mxu0 %v566
    %v568 = vand.u32 %v68, 4294901760
    %v569 = vsub.f32 %v68, %v568
    %v570 = vand.u32 %v569, 4294901760
    %v571 = vsub.f32 %v569, %v570
    %v572 = vand.u32 %v571, 4294901760
    %573 = vmatpush.msra.mxu0 %v572
    %v574 = vand.u32 %v67, 4294901760
    %v575 = vsub.f32 %v67, %v574
    %v576 = vand.u32 %v575, 4294901760
    %v577 = vsub.f32 %v575, %v576
    %v578 = vand.u32 %v577, 4294901760
    %579 = vmatpush.msra.mxu0 %v578
    %v580 = vand.u32 %v99, 4294901760
    %581 = vmatmul.f32.gmra.mxu0 %v580
    %v582 = vpop.f32.mrf.mxu0
    %v583 = vadd.f32 %v482, %v582
    %584 = vdwg.mxu0
    %v585 = vand.u32 %v82, 4294901760
    %v586 = vsub.f32 %v82, %v585
    %587 = vmatpush.msra.mxu0 %v586
    %v588 = vand.u32 %v81, 4294901760
    %v589 = vsub.f32 %v81, %v588
    %590 = vmatpush.msra.mxu0 %v589
    %v591 = vand.u32 %v80, 4294901760
    %v592 = vsub.f32 %v80, %v591
    %593 = vmatpush.msra.mxu0 %v592
    %v594 = vand.u32 %v79, 4294901760
    %v595 = vsub.f32 %v79, %v594
    %596 = vmatpush.msra.mxu0 %v595
    %v597 = vand.u32 %v78, 4294901760
    %v598 = vsub.f32 %v78, %v597
    %599 = vmatpush.msra.mxu0 %v598
    %v600 = vand.u32 %v77, 4294901760
    %v601 = vsub.f32 %v77, %v600
    %602 = vmatpush.msra.mxu0 %v601
    %v603 = vand.u32 %v76, 4294901760
    %v604 = vsub.f32 %v76, %v603
    %605 = vmatpush.msra.mxu0 %v604
    %v606 = vand.u32 %v75, 4294901760
    %v607 = vsub.f32 %v75, %v606
    %608 = vmatpush.msra.mxu0 %v607
    %v609 = vand.u32 %v74, 4294901760
    %v610 = vsub.f32 %v74, %v609
    %611 = vmatpush.msra.mxu0 %v610
    %v612 = vand.u32 %v73, 4294901760
    %v613 = vsub.f32 %v73, %v612
    %614 = vmatpush.msra.mxu0 %v613
    %v615 = vand.u32 %v72, 4294901760
    %v616 = vsub.f32 %v72, %v615
    %617 = vmatpush.msra.mxu0 %v616
    %v618 = vand.u32 %v71, 4294901760
    %v619 = vsub.f32 %v71, %v618
    %620 = vmatpush.msra.mxu0 %v619
    %v621 = vand.u32 %v70, 4294901760
    %v622 = vsub.f32 %v70, %v621
    %623 = vmatpush.msra.mxu0 %v622
    %v624 = vand.u32 %v69, 4294901760
    %v625 = vsub.f32 %v69, %v624
    %626 = vmatpush.msra.mxu0 %v625
    %v627 = vand.u32 %v68, 4294901760
    %v628 = vsub.f32 %v68, %v627
    %629 = vmatpush.msra.mxu0 %v628
    %v630 = vand.u32 %v67, 4294901760
    %v631 = vsub.f32 %v67, %v630
    %632 = vmatpush.msra.mxu0 %v631
    %v633 = vand.u32 %v99, 4294901760
    %v634 = vsub.f32 %v99, %v633
    %635 = vmatmul.f32.gmra.mxu0 %v634
    %v636 = vpop.f32.mrf.mxu0
    %v637 = vadd.f32 %v583, %v636
    %638 = vdwg.mxu0
    %v639 = vand.u32 %v82, 4294901760
    %640 = vmatpush.msra.mxu0 %v639
    %v641 = vand.u32 %v81, 4294901760
    %642 = vmatpush.msra.mxu0 %v641
    %v643 = vand.u32 %v80, 4294901760
    %644 = vmatpush.msra.mxu0 %v643
    %v645 = vand.u32 %v79, 4294901760
    %646 = vmatpush.msra.mxu0 %v645
    %v647 = vand.u32 %v78, 4294901760
    %648 = vmatpush.msra.mxu0 %v647
    %v649 = vand.u32 %v77, 4294901760
    %650 = vmatpush.msra.mxu0 %v649
    %v651 = vand.u32 %v76, 4294901760
    %652 = vmatpush.msra.mxu0 %v651
    %v653 = vand.u32 %v75, 4294901760
    %654 = vmatpush.msra.mxu0 %v653
    %v655 = vand.u32 %v74, 4294901760
    %656 = vmatpush.msra.mxu0 %v655
    %v657 = vand.u32 %v73, 4294901760
    %658 = vmatpush.msra.mxu0 %v657
    %v659 = vand.u32 %v72, 4294901760
    %660 = vmatpush.msra.mxu0 %v659
    %v661 = vand.u32 %v71, 4294901760
    %662 = vmatpush.msra.mxu0 %v661
    %v663 = vand.u32 %v70, 4294901760
    %664 = vmatpush.msra.mxu0 %v663
    %v665 = vand.u32 %v69, 4294901760
    %666 = vmatpush.msra.mxu0 %v665
    %v667 = vand.u32 %v68, 4294901760
    %668 = vmatpush.msra.mxu0 %v667
    %v669 = vand.u32 %v67, 4294901760
    %670 = vmatpush.msra.mxu0 %v669
    %v671 = vand.u32 %v99, 4294901760
    %v672 = vsub.f32 %v99, %v671
    %v673 = vand.u32 %v672, 4294901760
    %674 = vmatmul.f32.gmra.mxu0 %v673
    %v675 = vpop.f32.mrf.mxu0
    %v676 = vadd.f32 %v637, %v675
    %677 = vdwg.mxu0
    %v678 = vand.u32 %v82, 4294901760
    %v679 = vsub.f32 %v82, %v678
    %v680 = vand.u32 %v679, 4294901760
    %681 = vmatpush.msra.mxu0 %v680
    %v682 = vand.u32 %v81, 4294901760
    %v683 = vsub.f32 %v81, %v682
    %v684 = vand.u32 %v683, 4294901760
    %685 = vmatpush.msra.mxu0 %v684
    %v686 = vand.u32 %v80, 4294901760
    %v687 = vsub.f32 %v80, %v686
    %v688 = vand.u32 %v687, 4294901760
    %689 = vmatpush.msra.mxu0 %v688
    %v690 = vand.u32 %v79, 4294901760
    %v691 = vsub.f32 %v79, %v690
    %v692 = vand.u32 %v691, 4294901760
    %693 = vmatpush.msra.mxu0 %v692
    %v694 = vand.u32 %v78, 4294901760
    %v695 = vsub.f32 %v78, %v694
    %v696 = vand.u32 %v695, 4294901760
    %697 = vmatpush.msra.mxu0 %v696
    %v698 = vand.u32 %v77, 4294901760
    %v699 = vsub.f32 %v77, %v698
    %v700 = vand.u32 %v699, 4294901760
    %701 = vmatpush.msra.mxu0 %v700
    %v702 = vand.u32 %v76, 4294901760
    %v703 = vsub.f32 %v76, %v702
    %v704 = vand.u32 %v703, 4294901760
    %705 = vmatpush.msra.mxu0 %v704
    %v706 = vand.u32 %v75, 4294901760
    %v707 = vsub.f32 %v75, %v706
    %v708 = vand.u32 %v707, 4294901760
    %709 = vmatpush.msra.mxu0 %v708
    %v710 = vand.u32 %v74, 4294901760
    %v711 = vsub.f32 %v74, %v710
    %v712 = vand.u32 %v711, 4294901760
    %713 = vmatpush.msra.mxu0 %v712
    %v714 = vand.u32 %v73, 4294901760
    %v715 = vsub.f32 %v73, %v714
    %v716 = vand.u32 %v715, 4294901760
    %717 = vmatpush.msra.mxu0 %v716
    %v718 = vand.u32 %v72, 4294901760
    %v719 = vsub.f32 %v72, %v718
    %v720 = vand.u32 %v719, 4294901760
    %721 = vmatpush.msra.mxu0 %v720
    %v722 = vand.u32 %v71, 4294901760
    %v723 = vsub.f32 %v71, %v722
    %v724 = vand.u32 %v723, 4294901760
    %725 = vmatpush.msra.mxu0 %v724
    %v726 = vand.u32 %v70, 4294901760
    %v727 = vsub.f32 %v70, %v726
    %v728 = vand.u32 %v727, 4294901760
    %729 = vmatpush.msra.mxu0 %v728
    %v730 = vand.u32 %v69, 4294901760
    %v731 = vsub.f32 %v69, %v730
    %v732 = vand.u32 %v731, 4294901760
    %733 = vmatpush.msra.mxu0 %v732
    %v734 = vand.u32 %v68, 4294901760
    %v735 = vsub.f32 %v68, %v734
    %v736 = vand.u32 %v735, 4294901760
    %737 = vmatpush.msra.mxu0 %v736
    %v738 = vand.u32 %v67, 4294901760
    %v739 = vsub.f32 %v67, %v738
    %v740 = vand.u32 %v739, 4294901760
    %741 = vmatpush.msra.mxu0 %v740
    %v742 = vand.u32 %v99, 4294901760
    %743 = vmatmul.f32.gmra.mxu0 %v742
    %v744 = vpop.f32.mrf.mxu0
    %v745 = vadd.f32 %v676, %v744
    %746 = vdwg.mxu0
    %v747 = vand.u32 %v82, 4294901760
    %748 = vmatpush.msra.mxu0 %v747
    %v749 = vand.u32 %v81, 4294901760
    %750 = vmatpush.msra.mxu0 %v749
    %v751 = vand.u32 %v80, 4294901760
    %752 = vmatpush.msra.mxu0 %v751
    %v753 = vand.u32 %v79, 4294901760
    %754 = vmatpush.msra.mxu0 %v753
    %v755 = vand.u32 %v78, 4294901760
    %756 = vmatpush.msra.mxu0 %v755
    %v757 = vand.u32 %v77, 4294901760
    %758 = vmatpush.msra.mxu0 %v757
    %v759 = vand.u32 %v76, 4294901760
    %760 = vmatpush.msra.mxu0 %v759
    %v761 = vand.u32 %v75, 4294901760
    %762 = vmatpush.msra.mxu0 %v761
    %v763 = vand.u32 %v74, 4294901760
    %764 = vmatpush.msra.mxu0 %v763
    %v765 = vand.u32 %v73, 4294901760
    %766 = vmatpush.msra.mxu0 %v765
    %v767 = vand.u32 %v72, 4294901760
    %768 = vmatpush.msra.mxu0 %v767
    %v769 = vand.u32 %v71, 4294901760
    %770 = vmatpush.msra.mxu0 %v769
    %v771 = vand.u32 %v70, 4294901760
    %772 = vmatpush.msra.mxu0 %v771
    %v773 = vand.u32 %v69, 4294901760
    %774 = vmatpush.msra.mxu0 %v773
    %v775 = vand.u32 %v68, 4294901760
    %776 = vmatpush.msra.mxu0 %v775
    %v777 = vand.u32 %v67, 4294901760
    %778 = vmatpush.msra.mxu0 %v777
    %v779 = vand.u32 %v99, 4294901760
    %780 = vmatmul.f32.gmra.mxu0 %v779
    %v781 = vpop.f32.mrf.mxu0
    %v782 = vadd.f32 %v745, %v781
    %783 = vdwg.mxu0
    %784 = vst [vmem:[#allocation7] sm:$0xff] %v782
    // Predicated region
    $region22: #{tpu_custom_call.1} parent=1 // pred_check
      _
    $region23: #{tpu_custom_call.1} parent=1 // pred_check_branch
      %786 = sbr.rel (0) target = $region25
    $region24: #{tpu_custom_call.1} parent=1 // pred_region
      %788 = vsyncadd [#allocation4], 96
      %s789 = sshll.u32 [#allocation7], 4
      %s790 = int_to_ptr.vmem [resolvable:$true] %s789
      %s791 = sshll.u32 %s3, 4
      %s792 = int_to_ptr.hbm [resolvable:$true] %s791
      %797 = dma.vmem_to_hbm [thread:$0]  %s790, 32, %s792, [#allocation4], 32, 32, 2
    $region25: #{tpu_custom_call.1} parent=1 // pred_fallthru
      _
    // Predicated region
    $region26: #{tpu_custom_call.1} parent=1 // pred_check
      _
    $region27: #{tpu_custom_call.1} parent=1 // pred_check_branch
      %799 = sbr.rel (0) target = $region29
    $region28: #{tpu_custom_call.1} parent=1 // pred_region
      %801 = dma.done [#allocation4], 128
    $region29: #{tpu_custom_call.1} parent=1 // pred_fallthru
      _
    %802 = vsyncpa [#allocation3], 1
    %803 = vsyncpa [#allocation6], 1
    %804 = vsyncpa [#allocation4], 1

// kernel: tpu_custom_call.1
$region0: #{tpu_custom_call.1}
  #allocation0 [shape = 'u32[]', space=smem, size = 0x4, offset = 0x4, fixed_abs, tag = 'smem constant byte address 0x4 - core index']
  #allocation1 [shape = 'u32[72,128]{1,0:T(1,128)}', space=vmem, size = 0x9000, scoped, tag = 'internal scratch']
  %s0 = inlined_call_operand.hbm [shape: f32[2,256], index: 0, kind: input, shape index: {}]
  %s1 = inlined_call_operand.hbm [shape: f32[256,128], index: 1, kind: input, shape index: {}]
  %s2 = inlined_call_operand.vmem [shape: f32[1,128], index: 2, kind: input, shape index: {}]
  %s3 = inlined_call_operand.hbm [shape: f32[2,128], index: 3, kind: output, shape index: {}]
  %s4 = sld [smem:[#allocation0]]
  $region30: #{tpu_custom_call.1} parent=0
    _
  %s6 = ssub.s32 1, %s4
  %s7 = scalar_select 0, %s6, %s4
  $region1: #{tpu_custom_call.1} parent=0
    #allocation2 [shape = 'u8[8192]{0}', space=vmem, size = 0x2000, scoped, tag = 'input window, operand 0, single buffered']
    #allocation3 [shape = 's32[1]{0}', space=sflag, size = 0x4, scoped, tag = 'scoped memory for tpu_custom_call.1']
    #allocation4 [shape = 's32[1]{0}', space=sflag, size = 0x4, scoped, tag = 'scoped memory for tpu_custom_call.1']
    #allocation5 [shape = 'u8[131072]{0}', space=vmem, size = 0x20000, scoped, tag = 'input window, operand 1, single buffered']
    #allocation6 [shape = 's32[1]{0}', space=sflag, size = 0x4, scoped, tag = 'scoped memory for tpu_custom_call.1']
    #allocation7 [shape = 'u8[4096]{0}', space=vmem, size = 0x1000, scoped, tag = 'output window, operand 0, single buffered']
    %8 = vsyncpa [#allocation3], 0
    %9 = vsyncpa [#allocation6], 0
    %10 = vsyncpa [#allocation4], 0
    // Predicated region
    $region2: #{tpu_custom_call.1} parent=1 // pred_check
      _
    $region3: #{tpu_custom_call.1} parent=1 // pred_check_branch
      %12 = sbr.rel (0) target = $region5
    $region4: #{tpu_custom_call.1} parent=1 // pred_region
      %14 = vsyncadd [#allocation3], 192
      %s15 = sshll.u32 %s0, 4
      %s16 = int_to_ptr.hbm [resolvable:$true] %s15
      %s17 = sshll.u32 [#allocation2], 4
      %s18 = int_to_ptr.vmem [resolvable:$true] %s17
      %23 = dma.hbm_to_vmem [thread:$0]  %s16, 64, %s18, [#allocation3], 64, 64, 4
    $region5: #{tpu_custom_call.1} parent=1 // pred_fallthru
      _
    // Predicated region
    $region6: #{tpu_custom_call.1} parent=1 // pred_check
      _
    $region7: #{tpu_custom_call.1} parent=1 // pred_check_branch
      %25 = sbr.rel (0) target = $region9
    $region8: #{tpu_custom_call.1} parent=1 // pred_region
      %27 = vsyncadd [#allocation6], 0
      %s28 = sshll.u32 %s1, 4
      %s29 = int_to_ptr.hbm [resolvable:$true] %s28
      %s30 = sshll.u32 [#allocation5], 4
      %s31 = int_to_ptr.vmem [resolvable:$true] %s30
      %36 = dma.hbm_to_vmem [thread:$0]  %s29, 4096, %s31, [#allocation6], 128, 128, 8
    $region9: #{tpu_custom_call.1} parent=1 // pred_fallthru
      _
    // Predicated region
    $region10: #{tpu_custom_call.1} parent=1 // pred_check
      _
    $region11: #{tpu_custom_call.1} parent=1 // pred_check_branch
      %38 = sbr.rel (0) target = $region13
    $region12: #{tpu_custom_call.1} parent=1 // pred_region
      _
    $region13: #{tpu_custom_call.1} parent=1 // pred_fallthru
      _
    // Predicated region
    $region14: #{tpu_custom_call.1} parent=1 // pred_check
      _
    $region15: #{tpu_custom_call.1} parent=1 // pred_check_branch
      %40 = sbr.rel (0) target = $region17
    $region16: #{tpu_custom_call.1} parent=1 // pred_region
      %42 = dma.done [#allocation3], 256
    $region17: #{tpu_custom_call.1} parent=1 // pred_fallthru
      _
    // Predicated region
    $region18: #{tpu_custom_call.1} parent=1 // pred_check
      _
    $region19: #{tpu_custom_call.1} parent=1 // pred_check_branch
      %44 = sbr.rel (0) target = $region21
    $region20: #{tpu_custom_call.1} parent=1 // pred_region
      %46 = dma.done [#allocation6], 4096
    $region21: #{tpu_custom_call.1} parent=1 // pred_fallthru
      _
    %v47 = vld [vmem:[#allocation2] sm:$0xf]
    %v48 = vld [vmem:[#allocation2 + $0x4] sm:$0xf]
    %v49 = vld [vmem:[#allocation2 + $0x8] sm:$0xf]
    %v50 = vld [vmem:[#allocation2 + $0xc] sm:$0xf]
    %v51 = vld [vmem:[#allocation5] sm:$0xff]
    %v52 = vld [vmem:[#allocation5 + $0x8] sm:$0xff]
    %v53 = vld [vmem:[#allocation5 + $0x10] sm:$0xff]
    %v54 = vld [vmem:[#allocation5 + $0x18] sm:$0xff]
    %v55 = vld [vmem:[#allocation5 + $0x20] sm:$0xff]
    %v56 = vld [vmem:[#allocation5 + $0x28] sm:$0xff]
    %v57 = vld [vmem:[#allocation5 + $0x30] sm:$0xff]
    %v58 = vld [vmem:[#allocation5 + $0x38] sm:$0xff]
    %v59 = vld [vmem:[#allocation5 + $0x40] sm:$0xff]
    %v60 = vld [vmem:[#allocation5 + $0x48] sm:$0xff]
    %v61 = vld [vmem:[#allocation5 + $0x50] sm:$0xff]
    %v62 = vld [vmem:[#allocation5 + $0x58] sm:$0xff]
    %v63 = vld [vmem:[#allocation5 + $0x60] sm:$0xff]
    %v64 = vld [vmem:[#allocation5 + $0x68] sm:$0xff]
    %v65 = vld [vmem:[#allocation5 + $0x70] sm:$0xff]
    %v66 = vld [vmem:[#allocation5 + $0x78] sm:$0xff]
    %v67 = vld [vmem:[#allocation5 + $0x80] sm:$0xff]
    %v68 = vld [vmem:[#allocation5 + $0x88] sm:$0xff]
    %v69 = vld [vmem:[#allocation5 + $0x90] sm:$0xff]
    %v70 = vld [vmem:[#allocation5 + $0x98] sm:$0xff]
    %v71 = vld [vmem:[#allocation5 + $0xa0] sm:$0xff]
    %v72 = vld [vmem:[#allocation5 + $0xa8] sm:$0xff]
    %v73 = vld [vmem:[#allocation5 + $0xb0] sm:$0xff]
    %v74 = vld [vmem:[#allocation5 + $0xb8] sm:$0xff]
    %v75 = vld [vmem:[#allocation5 + $0xc0] sm:$0xff]
    %v76 = vld [vmem:[#allocation5 + $0xc8] sm:$0xff]
    %v77 = vld [vmem:[#allocation5 + $0xd0] sm:$0xff]
    %v78 = vld [vmem:[#allocation5 + $0xd8] sm:$0xff]
    %v79 = vld [vmem:[#allocation5 + $0xe0] sm:$0xff]
    %v80 = vld [vmem:[#allocation5 + $0xe8] sm:$0xff]
    %v81 = vld [vmem:[#allocation5 + $0xf0] sm:$0xff]
    %v82 = vld [vmem:[#allocation5 + $0xf8] sm:$0xff]
    %v83 = vld [vmem:[%s2] sm:$0x1]
    %v85 = vperm.slane %v83, 0
    %91 = vst [vmem:[#allocation1] ss:$4 sm:$0xff] %v47
    %s92 = scalar_lea.vmem [#allocation1], 1
    %93 = vst [vmem:[%s92] ss:$4 sm:$0xff] %v48
    %s94 = scalar_lea.vmem [#allocation1], 2
    %95 = vst [vmem:[%s94] ss:$4 sm:$0xff] %v49
    %s96 = scalar_lea.vmem [#allocation1], 3
    %97 = vst [vmem:[%s96] ss:$4 sm:$0xff] %v50
    %v98 = vld.sshfl [vmem:[#allocation1] sm:$0xff pattern:$0x73625140]
    %v99 = vld.sshfl [vmem:[#allocation1 + $0x8] sm:$0xff pattern:$0x73625140]
    %v102 = vand.u32 %v66, 4294901760
    %103 = vmatpush.msra.mxu0 %v102
    %v104 = vand.u32 %v65, 4294901760
    %105 = vmatpush.msra.mxu0 %v104
    %v106 = vand.u32 %v64, 4294901760
    %107 = vmatpush.msra.mxu0 %v106
    %v108 = vand.u32 %v63, 4294901760
    %109 = vmatpush.msra.mxu0 %v108
    %v110 = vand.u32 %v62, 4294901760
    %111 = vmatpush.msra.mxu0 %v110
    %v112 = vand.u32 %v61, 4294901760
    %113 = vmatpush.msra.mxu0 %v112
    %v114 = vand.u32 %v60, 4294901760
    %115 = vmatpush.msra.mxu0 %v114
    %v116 = vand.u32 %v59, 4294901760
    %117 = vmatpush.msra.mxu0 %v116
    %v118 = vand.u32 %v58, 4294901760
    %119 = vmatpush.msra.mxu0 %v118
    %v120 = vand.u32 %v57, 4294901760
    %121 = vmatpush.msra.mxu0 %v120
    %v122 = vand.u32 %v56, 4294901760
    %123 = vmatpush.msra.mxu0 %v122
    %v124 = vand.u32 %v55, 4294901760
    %125 = vmatpush.msra.mxu0 %v124
    %v126 = vand.u32 %v54, 4294901760
    %127 = vmatpush.msra.mxu0 %v126
    %v128 = vand.u32 %v53, 4294901760
    %129 = vmatpush.msra.mxu0 %v128
    %v130 = vand.u32 %v52, 4294901760
    %131 = vmatpush.msra.mxu0 %v130
    %v132 = vand.u32 %v51, 4294901760
    %133 = vmatpush.msra.mxu0 %v132
    %v134 = vand.u32 %v98, 4294901760
    %v135 = vsub.f32 %v98, %v134
    %v136 = vand.u32 %v135, 4294901760
    %v137 = vsub.f32 %v135, %v136
    %v138 = vand.u32 %v137, 4294901760
    %139 = vmatmul.f32.gmra.mxu0 %v138
    %v140 = vpop.f32.mrf.mxu0
    %v141 = vadd.f32 %v85, %v140
    %142 = vdwg.mxu0
    %v143 = vand.u32 %v66, 4294901760
    %v144 = vsub.f32 %v66, %v143
    %v145 = vand.u32 %v144, 4294901760
    %v146 = vsub.f32 %v144, %v145
    %v147 = vand.u32 %v146, 4294901760
    %148 = vmatpush.msra.mxu0 %v147
    %v149 = vand.u32 %v65, 4294901760
    %v150 = vsub.f32 %v65, %v149
    %v151 = vand.u32 %v150, 4294901760
    %v152 = vsub.f32 %v150, %v151
    %v153 = vand.u32 %v152, 4294901760
    %154 = vmatpush.msra.mxu0 %v153
    %v155 = vand.u32 %v64, 4294901760
    %v156 = vsub.f32 %v64, %v155
    %v157 = vand.u32 %v156, 4294901760
    %v158 = vsub.f32 %v156, %v157
    %v159 = vand.u32 %v158, 4294901760
    %160 = vmatpush.msra.mxu0 %v159
    %v161 = vand.u32 %v63, 4294901760
    %v162 = vsub.f32 %v63, %v161
    %v163 = vand.u32 %v162, 4294901760
    %v164 = vsub.f32 %v162, %v163
    %v165 = vand.u32 %v164, 4294901760
    %166 = vmatpush.msra.mxu0 %v165
    %v167 = vand.u32 %v62, 4294901760
    %v168 = vsub.f32 %v62, %v167
    %v169 = vand.u32 %v168, 4294901760
    %v170 = vsub.f32 %v168, %v169
    %v171 = vand.u32 %v170, 4294901760
    %172 = vmatpush.msra.mxu0 %v171
    %v173 = vand.u32 %v61, 4294901760
    %v174 = vsub.f32 %v61, %v173
    %v175 = vand.u32 %v174, 4294901760
    %v176 = vsub.f32 %v174, %v175
    %v177 = vand.u32 %v176, 4294901760
    %178 = vmatpush.msra.mxu0 %v177
    %v179 = vand.u32 %v60, 4294901760
    %v180 = vsub.f32 %v60, %v179
    %v181 = vand.u32 %v180, 4294901760
    %v182 = vsub.f32 %v180, %v181
    %v183 = vand.u32 %v182, 4294901760
    %184 = vmatpush.msra.mxu0 %v183
    %v185 = vand.u32 %v59, 4294901760
    %v186 = vsub.f32 %v59, %v185
    %v187 = vand.u32 %v186, 4294901760
    %v188 = vsub.f32 %v186, %v187
    %v189 = vand.u32 %v188, 4294901760
    %190 = vmatpush.msra.mxu0 %v189
    %v191 = vand.u32 %v58, 4294901760
    %v192 = vsub.f32 %v58, %v191
    %v193 = vand.u32 %v192, 4294901760
    %v194 = vsub.f32 %v192, %v193
    %v195 = vand.u32 %v194, 4294901760
    %196 = vmatpush.msra.mxu0 %v195
    %v197 = vand.u32 %v57, 4294901760
    %v198 = vsub.f32 %v57, %v197
    %v199 = vand.u32 %v198, 4294901760
    %v200 = vsub.f32 %v198, %v199
    %v201 = vand.u32 %v200, 4294901760
    %202 = vmatpush.msra.mxu0 %v201
    %v203 = vand.u32 %v56, 4294901760
    %v204 = vsub.f32 %v56, %v203
    %v205 = vand.u32 %v204, 4294901760
    %v206 = vsub.f32 %v204, %v205
    %v207 = vand.u32 %v206, 4294901760
    %208 = vmatpush.msra.mxu0 %v207
    %v209 = vand.u32 %v55, 4294901760
    %v210 = vsub.f32 %v55, %v209
    %v211 = vand.u32 %v210, 4294901760
    %v212 = vsub.f32 %v210, %v211
    %v213 = vand.u32 %v212, 4294901760
    %214 = vmatpush.msra.mxu0 %v213
    %v215 = vand.u32 %v54, 4294901760
    %v216 = vsub.f32 %v54, %v215
    %v217 = vand.u32 %v216, 4294901760
    %v218 = vsub.f32 %v216, %v217
    %v219 = vand.u32 %v218, 4294901760
    %220 = vmatpush.msra.mxu0 %v219
    %v221 = vand.u32 %v53, 4294901760
    %v222 = vsub.f32 %v53, %v221
    %v223 = vand.u32 %v222, 4294901760
    %v224 = vsub.f32 %v222, %v223
    %v225 = vand.u32 %v224, 4294901760
    %226 = vmatpush.msra.mxu0 %v225
    %v227 = vand.u32 %v52, 4294901760
    %v228 = vsub.f32 %v52, %v227
    %v229 = vand.u32 %v228, 4294901760
    %v230 = vsub.f32 %v228, %v229
    %v231 = vand.u32 %v230, 4294901760
    %232 = vmatpush.msra.mxu0 %v231
    %v233 = vand.u32 %v51, 4294901760
    %v234 = vsub.f32 %v51, %v233
    %v235 = vand.u32 %v234, 4294901760
    %v236 = vsub.f32 %v234, %v235
    %v237 = vand.u32 %v236, 4294901760
    %238 = vmatpush.msra.mxu0 %v237
    %v239 = vand.u32 %v98, 4294901760
    %240 = vmatmul.f32.gmra.mxu0 %v239
    %v241 = vpop.f32.mrf.mxu0
    %v242 = vadd.f32 %v141, %v241
    %243 = vdwg.mxu0
    %v244 = vand.u32 %v66, 4294901760
    %v245 = vsub.f32 %v66, %v244
    %246 = vmatpush.msra.mxu0 %v245
    %v247 = vand.u32 %v65, 4294901760
    %v248 = vsub.f32 %v65, %v247
    %249 = vmatpush.msra.mxu0 %v248
    %v250 = vand.u32 %v64, 4294901760
    %v251 = vsub.f32 %v64, %v250
    %252 = vmatpush.msra.mxu0 %v251
    %v253 = vand.u32 %v63, 4294901760
    %v254 = vsub.f32 %v63, %v253
    %255 = vmatpush.msra.mxu0 %v254
    %v256 = vand.u32 %v62, 4294901760
    %v257 = vsub.f32 %v62, %v256
    %258 = vmatpush.msra.mxu0 %v257
    %v259 = vand.u32 %v61, 4294901760
    %v260 = vsub.f32 %v61, %v259
    %261 = vmatpush.msra.mxu0 %v260
    %v262 = vand.u32 %v60, 4294901760
    %v263 = vsub.f32 %v60, %v262
    %264 = vmatpush.msra.mxu0 %v263
    %v265 = vand.u32 %v59, 4294901760
    %v266 = vsub.f32 %v59, %v265
    %267 = vmatpush.msra.mxu0 %v266
    %v268 = vand.u32 %v58, 4294901760
    %v269 = vsub.f32 %v58, %v268
    %270 = vmatpush.msra.mxu0 %v269
    %v271 = vand.u32 %v57, 4294901760
    %v272 = vsub.f32 %v57, %v271
    %273 = vmatpush.msra.mxu0 %v272
    %v274 = vand.u32 %v56, 4294901760
    %v275 = vsub.f32 %v56, %v274
    %276 = vmatpush.msra.mxu0 %v275
    %v277 = vand.u32 %v55, 4294901760
    %v278 = vsub.f32 %v55, %v277
    %279 = vmatpush.msra.mxu0 %v278
    %v280 = vand.u32 %v54, 4294901760
    %v281 = vsub.f32 %v54, %v280
    %282 = vmatpush.msra.mxu0 %v281
    %v283 = vand.u32 %v53, 4294901760
    %v284 = vsub.f32 %v53, %v283
    %285 = vmatpush.msra.mxu0 %v284
    %v286 = vand.u32 %v52, 4294901760
    %v287 = vsub.f32 %v52, %v286
    %288 = vmatpush.msra.mxu0 %v287
    %v289 = vand.u32 %v51, 4294901760
    %v290 = vsub.f32 %v51, %v289
    %291 = vmatpush.msra.mxu0 %v290
    %v292 = vand.u32 %v98, 4294901760
    %v293 = vsub.f32 %v98, %v292
    %294 = vmatmul.f32.gmra.mxu0 %v293
    %v295 = vpop.f32.mrf.mxu0
    %v296 = vadd.f32 %v242, %v295
    %297 = vdwg.mxu0
    %v298 = vand.u32 %v66, 4294901760
    %299 = vmatpush.msra.mxu0 %v298
    %v300 = vand.u32 %v65, 4294901760
    %301 = vmatpush.msra.mxu0 %v300
    %v302 = vand.u32 %v64, 4294901760
    %303 = vmatpush.msra.mxu0 %v302
    %v304 = vand.u32 %v63, 4294901760
    %305 = vmatpush.msra.mxu0 %v304
    %v306 = vand.u32 %v62, 4294901760
    %307 = vmatpush.msra.mxu0 %v306
    %v308 = vand.u32 %v61, 4294901760
    %309 = vmatpush.msra.mxu0 %v308
    %v310 = vand.u32 %v60, 4294901760
    %311 = vmatpush.msra.mxu0 %v310
    %v312 = vand.u32 %v59, 4294901760
    %313 = vmatpush.msra.mxu0 %v312
    %v314 = vand.u32 %v58, 4294901760
    %315 = vmatpush.msra.mxu0 %v314
    %v316 = vand.u32 %v57, 4294901760
    %317 = vmatpush.msra.mxu0 %v316
    %v318 = vand.u32 %v56, 4294901760
    %319 = vmatpush.msra.mxu0 %v318
    %v320 = vand.u32 %v55, 4294901760
    %321 = vmatpush.msra.mxu0 %v320
    %v322 = vand.u32 %v54, 4294901760
    %323 = vmatpush.msra.mxu0 %v322
    %v324 = vand.u32 %v53, 4294901760
    %325 = vmatpush.msra.mxu0 %v324
    %v326 = vand.u32 %v52, 4294901760
    %327 = vmatpush.msra.mxu0 %v326
    %v328 = vand.u32 %v51, 4294901760
    %329 = vmatpush.msra.mxu0 %v328
    %v330 = vand.u32 %v98, 4294901760
    %v331 = vsub.f32 %v98, %v330
    %v332 = vand.u32 %v331, 4294901760
    %333 = vmatmul.f32.gmra.mxu0 %v332
    %v334 = vpop.f32.mrf.mxu0
    %v335 = vadd.f32 %v296, %v334
    %336 = vdwg.mxu0
    %v337 = vand.u32 %v66, 4294901760
    %v338 = vsub.f32 %v66, %v337
    %v339 = vand.u32 %v338, 4294901760
    %340 = vmatpush.msra.mxu0 %v339
    %v341 = vand.u32 %v65, 4294901760
    %v342 = vsub.f32 %v65, %v341
    %v343 = vand.u32 %v342, 4294901760
    %344 = vmatpush.msra.mxu0 %v343
    %v345 = vand.u32 %v64, 4294901760
    %v346 = vsub.f32 %v64, %v345
    %v347 = vand.u32 %v346, 4294901760
    %348 = vmatpush.msra.mxu0 %v347
    %v349 = vand.u32 %v63, 4294901760
    %v350 = vsub.f32 %v63, %v349
    %v351 = vand.u32 %v350, 4294901760
    %352 = vmatpush.msra.mxu0 %v351
    %v353 = vand.u32 %v62, 4294901760
    %v354 = vsub.f32 %v62, %v353
    %v355 = vand.u32 %v354, 4294901760
    %356 = vmatpush.msra.mxu0 %v355
    %v357 = vand.u32 %v61, 4294901760
    %v358 = vsub.f32 %v61, %v357
    %v359 = vand.u32 %v358, 4294901760
    %360 = vmatpush.msra.mxu0 %v359
    %v361 = vand.u32 %v60, 4294901760
    %v362 = vsub.f32 %v60, %v361
    %v363 = vand.u32 %v362, 4294901760
    %364 = vmatpush.msra.mxu0 %v363
    %v365 = vand.u32 %v59, 4294901760
    %v366 = vsub.f32 %v59, %v365
    %v367 = vand.u32 %v366, 4294901760
    %368 = vmatpush.msra.mxu0 %v367
    %v369 = vand.u32 %v58, 4294901760
    %v370 = vsub.f32 %v58, %v369
    %v371 = vand.u32 %v370, 4294901760
    %372 = vmatpush.msra.mxu0 %v371
    %v373 = vand.u32 %v57, 4294901760
    %v374 = vsub.f32 %v57, %v373
    %v375 = vand.u32 %v374, 4294901760
    %376 = vmatpush.msra.mxu0 %v375
    %v377 = vand.u32 %v56, 4294901760
    %v378 = vsub.f32 %v56, %v377
    %v379 = vand.u32 %v378, 4294901760
    %380 = vmatpush.msra.mxu0 %v379
    %v381 = vand.u32 %v55, 4294901760
    %v382 = vsub.f32 %v55, %v381
    %v383 = vand.u32 %v382, 4294901760
    %384 = vmatpush.msra.mxu0 %v383
    %v385 = vand.u32 %v54, 4294901760
    %v386 = vsub.f32 %v54, %v385
    %v387 = vand.u32 %v386, 4294901760
    %388 = vmatpush.msra.mxu0 %v387
    %v389 = vand.u32 %v53, 4294901760
    %v390 = vsub.f32 %v53, %v389
    %v391 = vand.u32 %v390, 4294901760
    %392 = vmatpush.msra.mxu0 %v391
    %v393 = vand.u32 %v52, 4294901760
    %v394 = vsub.f32 %v52, %v393
    %v395 = vand.u32 %v394, 4294901760
    %396 = vmatpush.msra.mxu0 %v395
    %v397 = vand.u32 %v51, 4294901760
    %v398 = vsub.f32 %v51, %v397
    %v399 = vand.u32 %v398, 4294901760
    %400 = vmatpush.msra.mxu0 %v399
    %v401 = vand.u32 %v98, 4294901760
    %402 = vmatmul.f32.gmra.mxu0 %v401
    %v403 = vpop.f32.mrf.mxu0
    %v404 = vadd.f32 %v335, %v403
    %405 = vdwg.mxu0
    %v406 = vand.u32 %v66, 4294901760
    %407 = vmatpush.msra.mxu0 %v406
    %v408 = vand.u32 %v65, 4294901760
    %409 = vmatpush.msra.mxu0 %v408
    %v410 = vand.u32 %v64, 4294901760
    %411 = vmatpush.msra.mxu0 %v410
    %v412 = vand.u32 %v63, 4294901760
    %413 = vmatpush.msra.mxu0 %v412
    %v414 = vand.u32 %v62, 4294901760
    %415 = vmatpush.msra.mxu0 %v414
    %v416 = vand.u32 %v61, 4294901760
    %417 = vmatpush.msra.mxu0 %v416
    %v418 = vand.u32 %v60, 4294901760
    %419 = vmatpush.msra.mxu0 %v418
    %v420 = vand.u32 %v59, 4294901760
    %421 = vmatpush.msra.mxu0 %v420
    %v422 = vand.u32 %v58, 4294901760
    %423 = vmatpush.msra.mxu0 %v422
    %v424 = vand.u32 %v57, 4294901760
    %425 = vmatpush.msra.mxu0 %v424
    %v426 = vand.u32 %v56, 4294901760
    %427 = vmatpush.msra.mxu0 %v426
    %v428 = vand.u32 %v55, 4294901760
    %429 = vmatpush.msra.mxu0 %v428
    %v430 = vand.u32 %v54, 4294901760
    %431 = vmatpush.msra.mxu0 %v430
    %v432 = vand.u32 %v53, 4294901760
    %433 = vmatpush.msra.mxu0 %v432
    %v434 = vand.u32 %v52, 4294901760
    %435 = vmatpush.msra.mxu0 %v434
    %v436 = vand.u32 %v51, 4294901760
    %437 = vmatpush.msra.mxu0 %v436
    %v438 = vand.u32 %v98, 4294901760
    %439 = vmatmul.f32.gmra.mxu0 %v438
    %v440 = vpop.f32.mrf.mxu0
    %v441 = vadd.f32 %v404, %v440
    %442 = vdwg.mxu0
    %v443 = vand.u32 %v82, 4294901760
    %444 = vmatpush.msra.mxu0 %v443
    %v445 = vand.u32 %v81, 4294901760
    %446 = vmatpush.msra.mxu0 %v445
    %v447 = vand.u32 %v80, 4294901760
    %448 = vmatpush.msra.mxu0 %v447
    %v449 = vand.u32 %v79, 4294901760
    %450 = vmatpush.msra.mxu0 %v449
    %v451 = vand.u32 %v78, 4294901760
    %452 = vmatpush.msra.mxu0 %v451
    %v453 = vand.u32 %v77, 4294901760
    %454 = vmatpush.msra.mxu0 %v453
    %v455 = vand.u32 %v76, 4294901760
    %456 = vmatpush.msra.mxu0 %v455
    %v457 = vand.u32 %v75, 4294901760
    %458 = vmatpush.msra.mxu0 %v457
    %v459 = vand.u32 %v74, 4294901760
    %460 = vmatpush.msra.mxu0 %v459
    %v461 = vand.u32 %v73, 4294901760
    %462 = vmatpush.msra.mxu0 %v461
    %v463 = vand.u32 %v72, 4294901760
    %464 = vmatpush.msra.mxu0 %v463
    %v465 = vand.u32 %v71, 4294901760
    %466 = vmatpush.msra.mxu0 %v465
    %v467 = vand.u32 %v70, 4294901760
    %468 = vmatpush.msra.mxu0 %v467
    %v469 = vand.u32 %v69, 4294901760
    %470 = vmatpush.msra.mxu0 %v469
    %v471 = vand.u32 %v68, 4294901760
    %472 = vmatpush.msra.mxu0 %v471
    %v473 = vand.u32 %v67, 4294901760
    %474 = vmatpush.msra.mxu0 %v473
    %v475 = vand.u32 %v99, 4294901760
    %v476 = vsub.f32 %v99, %v475
    %v477 = vand.u32 %v476, 4294901760
    %v478 = vsub.f32 %v476, %v477
    %v479 = vand.u32 %v478, 4294901760
    %480 = vmatmul.f32.gmra.mxu0 %v479
    %v481 = vpop.f32.mrf.mxu0
    %v482 = vadd.f32 %v441, %v481
    %483 = vdwg.mxu0
    %v484 = vand.u32 %v82, 4294901760
    %v485 = vsub.f32 %v82, %v484
    %v486 = vand.u32 %v485, 4294901760
    %v487 = vsub.f32 %v485, %v486
    %v488 = vand.u32 %v487, 4294901760
    %489 = vmatpush.msra.mxu0 %v488
    %v490 = vand.u32 %v81, 4294901760
    %v491 = vsub.f32 %v81, %v490
    %v492 = vand.u32 %v491, 4294901760
    %v493 = vsub.f32 %v491, %v492
    %v494 = vand.u32 %v493, 4294901760
    %495 = vmatpush.msra.mxu0 %v494
    %v496 = vand.u32 %v80, 4294901760
    %v497 = vsub.f32 %v80, %v496
    %v498 = vand.u32 %v497, 4294901760
    %v499 = vsub.f32 %v497, %v498
    %v500 = vand.u32 %v499, 4294901760
    %501 = vmatpush.msra.mxu0 %v500
    %v502 = vand.u32 %v79, 4294901760
    %v503 = vsub.f32 %v79, %v502
    %v504 = vand.u32 %v503, 4294901760
    %v505 = vsub.f32 %v503, %v504
    %v506 = vand.u32 %v505, 4294901760
    %507 = vmatpush.msra.mxu0 %v506
    %v508 = vand.u32 %v78, 4294901760
    %v509 = vsub.f32 %v78, %v508
    %v510 = vand.u32 %v509, 4294901760
    %v511 = vsub.f32 %v509, %v510
    %v512 = vand.u32 %v511, 4294901760
    %513 = vmatpush.msra.mxu0 %v512
    %v514 = vand.u32 %v77, 4294901760
    %v515 = vsub.f32 %v77, %v514
    %v516 = vand.u32 %v515, 4294901760
    %v517 = vsub.f32 %v515, %v516
    %v518 = vand.u32 %v517, 4294901760
    %519 = vmatpush.msra.mxu0 %v518
    %v520 = vand.u32 %v76, 4294901760
    %v521 = vsub.f32 %v76, %v520
    %v522 = vand.u32 %v521, 4294901760
    %v523 = vsub.f32 %v521, %v522
    %v524 = vand.u32 %v523, 4294901760
    %525 = vmatpush.msra.mxu0 %v524
    %v526 = vand.u32 %v75, 4294901760
    %v527 = vsub.f32 %v75, %v526
    %v528 = vand.u32 %v527, 4294901760
    %v529 = vsub.f32 %v527, %v528
    %v530 = vand.u32 %v529, 4294901760
    %531 = vmatpush.msra.mxu0 %v530
    %v532 = vand.u32 %v74, 4294901760
    %v533 = vsub.f32 %v74, %v532
    %v534 = vand.u32 %v533, 4294901760
    %v535 = vsub.f32 %v533, %v534
    %v536 = vand.u32 %v535, 4294901760
    %537 = vmatpush.msra.mxu0 %v536
    %v538 = vand.u32 %v73, 4294901760
    %v539 = vsub.f32 %v73, %v538
    %v540 = vand.u32 %v539, 4294901760
    %v541 = vsub.f32 %v539, %v540
    %v542 = vand.u32 %v541, 4294901760
    %543 = vmatpush.msra.mxu0 %v542
    %v544 = vand.u32 %v72, 4294901760
    %v545 = vsub.f32 %v72, %v544
    %v546 = vand.u32 %v545, 4294901760
    %v547 = vsub.f32 %v545, %v546
    %v548 = vand.u32 %v547, 4294901760
    %549 = vmatpush.msra.mxu0 %v548
    %v550 = vand.u32 %v71, 4294901760
    %v551 = vsub.f32 %v71, %v550
    %v552 = vand.u32 %v551, 4294901760
    %v553 = vsub.f32 %v551, %v552
    %v554 = vand.u32 %v553, 4294901760
    %555 = vmatpush.msra.mxu0 %v554
    %v556 = vand.u32 %v70, 4294901760
    %v557 = vsub.f32 %v70, %v556
    %v558 = vand.u32 %v557, 4294901760
    %v559 = vsub.f32 %v557, %v558
    %v560 = vand.u32 %v559, 4294901760
    %561 = vmatpush.msra.mxu0 %v560
    %v562 = vand.u32 %v69, 4294901760
    %v563 = vsub.f32 %v69, %v562
    %v564 = vand.u32 %v563, 4294901760
    %v565 = vsub.f32 %v563, %v564
    %v566 = vand.u32 %v565, 4294901760
    %567 = vmatpush.msra.mxu0 %v566
    %v568 = vand.u32 %v68, 4294901760
    %v569 = vsub.f32 %v68, %v568
    %v570 = vand.u32 %v569, 4294901760
    %v571 = vsub.f32 %v569, %v570
    %v572 = vand.u32 %v571, 4294901760
    %573 = vmatpush.msra.mxu0 %v572
    %v574 = vand.u32 %v67, 4294901760
    %v575 = vsub.f32 %v67, %v574
    %v576 = vand.u32 %v575, 4294901760
    %v577 = vsub.f32 %v575, %v576
    %v578 = vand.u32 %v577, 4294901760
    %579 = vmatpush.msra.mxu0 %v578
    %v580 = vand.u32 %v99, 4294901760
    %581 = vmatmul.f32.gmra.mxu0 %v580
    %v582 = vpop.f32.mrf.mxu0
    %v583 = vadd.f32 %v482, %v582
    %584 = vdwg.mxu0
    %v585 = vand.u32 %v82, 4294901760
    %v586 = vsub.f32 %v82, %v585
    %587 = vmatpush.msra.mxu0 %v586
    %v588 = vand.u32 %v81, 4294901760
    %v589 = vsub.f32 %v81, %v588
    %590 = vmatpush.msra.mxu0 %v589
    %v591 = vand.u32 %v80, 4294901760
    %v592 = vsub.f32 %v80, %v591
    %593 = vmatpush.msra.mxu0 %v592
    %v594 = vand.u32 %v79, 4294901760
    %v595 = vsub.f32 %v79, %v594
    %596 = vmatpush.msra.mxu0 %v595
    %v597 = vand.u32 %v78, 4294901760
    %v598 = vsub.f32 %v78, %v597
    %599 = vmatpush.msra.mxu0 %v598
    %v600 = vand.u32 %v77, 4294901760
    %v601 = vsub.f32 %v77, %v600
    %602 = vmatpush.msra.mxu0 %v601
    %v603 = vand.u32 %v76, 4294901760
    %v604 = vsub.f32 %v76, %v603
    %605 = vmatpush.msra.mxu0 %v604
    %v606 = vand.u32 %v75, 4294901760
    %v607 = vsub.f32 %v75, %v606
    %608 = vmatpush.msra.mxu0 %v607
    %v609 = vand.u32 %v74, 4294901760
    %v610 = vsub.f32 %v74, %v609
    %611 = vmatpush.msra.mxu0 %v610
    %v612 = vand.u32 %v73, 4294901760
    %v613 = vsub.f32 %v73, %v612
    %614 = vmatpush.msra.mxu0 %v613
    %v615 = vand.u32 %v72, 4294901760
    %v616 = vsub.f32 %v72, %v615
    %617 = vmatpush.msra.mxu0 %v616
    %v618 = vand.u32 %v71, 4294901760
    %v619 = vsub.f32 %v71, %v618
    %620 = vmatpush.msra.mxu0 %v619
    %v621 = vand.u32 %v70, 4294901760
    %v622 = vsub.f32 %v70, %v621
    %623 = vmatpush.msra.mxu0 %v622
    %v624 = vand.u32 %v69, 4294901760
    %v625 = vsub.f32 %v69, %v624
    %626 = vmatpush.msra.mxu0 %v625
    %v627 = vand.u32 %v68, 4294901760
    %v628 = vsub.f32 %v68, %v627
    %629 = vmatpush.msra.mxu0 %v628
    %v630 = vand.u32 %v67, 4294901760
    %v631 = vsub.f32 %v67, %v630
    %632 = vmatpush.msra.mxu0 %v631
    %v633 = vand.u32 %v99, 4294901760
    %v634 = vsub.f32 %v99, %v633
    %635 = vmatmul.f32.gmra.mxu0 %v634
    %v636 = vpop.f32.mrf.mxu0
    %v637 = vadd.f32 %v583, %v636
    %638 = vdwg.mxu0
    %v639 = vand.u32 %v82, 4294901760
    %640 = vmatpush.msra.mxu0 %v639
    %v641 = vand.u32 %v81, 4294901760
    %642 = vmatpush.msra.mxu0 %v641
    %v643 = vand.u32 %v80, 4294901760
    %644 = vmatpush.msra.mxu0 %v643
    %v645 = vand.u32 %v79, 4294901760
    %646 = vmatpush.msra.mxu0 %v645
    %v647 = vand.u32 %v78, 4294901760
    %648 = vmatpush.msra.mxu0 %v647
    %v649 = vand.u32 %v77, 4294901760
    %650 = vmatpush.msra.mxu0 %v649
    %v651 = vand.u32 %v76, 4294901760
    %652 = vmatpush.msra.mxu0 %v651
    %v653 = vand.u32 %v75, 4294901760
    %654 = vmatpush.msra.mxu0 %v653
    %v655 = vand.u32 %v74, 4294901760
    %656 = vmatpush.msra.mxu0 %v655
    %v657 = vand.u32 %v73, 4294901760
    %658 = vmatpush.msra.mxu0 %v657
    %v659 = vand.u32 %v72, 4294901760
    %660 = vmatpush.msra.mxu0 %v659
    %v661 = vand.u32 %v71, 4294901760
    %662 = vmatpush.msra.mxu0 %v661
    %v663 = vand.u32 %v70, 4294901760
    %664 = vmatpush.msra.mxu0 %v663
    %v665 = vand.u32 %v69, 4294901760
    %666 = vmatpush.msra.mxu0 %v665
    %v667 = vand.u32 %v68, 4294901760
    %668 = vmatpush.msra.mxu0 %v667
    %v669 = vand.u32 %v67, 4294901760
    %670 = vmatpush.msra.mxu0 %v669
    %v671 = vand.u32 %v99, 4294901760
    %v672 = vsub.f32 %v99, %v671
    %v673 = vand.u32 %v672, 4294901760
    %674 = vmatmul.f32.gmra.mxu0 %v673
    %v675 = vpop.f32.mrf.mxu0
    %v676 = vadd.f32 %v637, %v675
    %677 = vdwg.mxu0
    %v678 = vand.u32 %v82, 4294901760
    %v679 = vsub.f32 %v82, %v678
    %v680 = vand.u32 %v679, 4294901760
    %681 = vmatpush.msra.mxu0 %v680
    %v682 = vand.u32 %v81, 4294901760
    %v683 = vsub.f32 %v81, %v682
    %v684 = vand.u32 %v683, 4294901760
    %685 = vmatpush.msra.mxu0 %v684
    %v686 = vand.u32 %v80, 4294901760
    %v687 = vsub.f32 %v80, %v686
    %v688 = vand.u32 %v687, 4294901760
    %689 = vmatpush.msra.mxu0 %v688
    %v690 = vand.u32 %v79, 4294901760
    %v691 = vsub.f32 %v79, %v690
    %v692 = vand.u32 %v691, 4294901760
    %693 = vmatpush.msra.mxu0 %v692
    %v694 = vand.u32 %v78, 4294901760
    %v695 = vsub.f32 %v78, %v694
    %v696 = vand.u32 %v695, 4294901760
    %697 = vmatpush.msra.mxu0 %v696
    %v698 = vand.u32 %v77, 4294901760
    %v699 = vsub.f32 %v77, %v698
    %v700 = vand.u32 %v699, 4294901760
    %701 = vmatpush.msra.mxu0 %v700
    %v702 = vand.u32 %v76, 4294901760
    %v703 = vsub.f32 %v76, %v702
    %v704 = vand.u32 %v703, 4294901760
    %705 = vmatpush.msra.mxu0 %v704
    %v706 = vand.u32 %v75, 4294901760
    %v707 = vsub.f32 %v75, %v706
    %v708 = vand.u32 %v707, 4294901760
    %709 = vmatpush.msra.mxu0 %v708
    %v710 = vand.u32 %v74, 4294901760
    %v711 = vsub.f32 %v74, %v710
    %v712 = vand.u32 %v711, 4294901760
    %713 = vmatpush.msra.mxu0 %v712
    %v714 = vand.u32 %v73, 4294901760
    %v715 = vsub.f32 %v73, %v714
    %v716 = vand.u32 %v715, 4294901760
    %717 = vmatpush.msra.mxu0 %v716
    %v718 = vand.u32 %v72, 4294901760
    %v719 = vsub.f32 %v72, %v718
    %v720 = vand.u32 %v719, 4294901760
    %721 = vmatpush.msra.mxu0 %v720
    %v722 = vand.u32 %v71, 4294901760
    %v723 = vsub.f32 %v71, %v722
    %v724 = vand.u32 %v723, 4294901760
    %725 = vmatpush.msra.mxu0 %v724
    %v726 = vand.u32 %v70, 4294901760
    %v727 = vsub.f32 %v70, %v726
    %v728 = vand.u32 %v727, 4294901760
    %729 = vmatpush.msra.mxu0 %v728
    %v730 = vand.u32 %v69, 4294901760
    %v731 = vsub.f32 %v69, %v730
    %v732 = vand.u32 %v731, 4294901760
    %733 = vmatpush.msra.mxu0 %v732
    %v734 = vand.u32 %v68, 4294901760
    %v735 = vsub.f32 %v68, %v734
    %v736 = vand.u32 %v735, 4294901760
    %737 = vmatpush.msra.mxu0 %v736
    %v738 = vand.u32 %v67, 4294901760
    %v739 = vsub.f32 %v67, %v738
    %v740 = vand.u32 %v739, 4294901760
    %741 = vmatpush.msra.mxu0 %v740
    %v742 = vand.u32 %v99, 4294901760
    %743 = vmatmul.f32.gmra.mxu0 %v742
    %v744 = vpop.f32.mrf.mxu0
    %v745 = vadd.f32 %v676, %v744
    %746 = vdwg.mxu0
    %v747 = vand.u32 %v82, 4294901760
    %748 = vmatpush.msra.mxu0 %v747
    %v749 = vand.u32 %v81, 4294901760
    %750 = vmatpush.msra.mxu0 %v749
    %v751 = vand.u32 %v80, 4294901760
    %752 = vmatpush.msra.mxu0 %v751
    %v753 = vand.u32 %v79, 4294901760
    %754 = vmatpush.msra.mxu0 %v753
    %v755 = vand.u32 %v78, 4294901760
    %756 = vmatpush.msra.mxu0 %v755
    %v757 = vand.u32 %v77, 4294901760
    %758 = vmatpush.msra.mxu0 %v757
    %v759 = vand.u32 %v76, 4294901760
    %760 = vmatpush.msra.mxu0 %v759
    %v761 = vand.u32 %v75, 4294901760
    %762 = vmatpush.msra.mxu0 %v761
    %v763 = vand.u32 %v74, 4294901760
    %764 = vmatpush.msra.mxu0 %v763
    %v765 = vand.u32 %v73, 4294901760
    %766 = vmatpush.msra.mxu0 %v765
    %v767 = vand.u32 %v72, 4294901760
    %768 = vmatpush.msra.mxu0 %v767
    %v769 = vand.u32 %v71, 4294901760
    %770 = vmatpush.msra.mxu0 %v769
    %v771 = vand.u32 %v70, 4294901760
    %772 = vmatpush.msra.mxu0 %v771
    %v773 = vand.u32 %v69, 4294901760
    %774 = vmatpush.msra.mxu0 %v773
    %v775 = vand.u32 %v68, 4294901760
    %776 = vmatpush.msra.mxu0 %v775
    %v777 = vand.u32 %v67, 4294901760
    %778 = vmatpush.msra.mxu0 %v777
    %v779 = vand.u32 %v99, 4294901760
    %780 = vmatmul.f32.gmra.mxu0 %v779
    %v781 = vpop.f32.mrf.mxu0
    %v782 = vadd.f32 %v745, %v781
    %783 = vdwg.mxu0
    %784 = vst [vmem:[#allocation7] sm:$0xff] %v782
    // Predicated region
    $region22: #{tpu_custom_call.1} parent=1 // pred_check
      _
    $region23: #{tpu_custom_call.1} parent=1 // pred_check_branch
      %786 = sbr.rel (0) target = $region25
    $region24: #{tpu_custom_call.1} parent=1 // pred_region
      %788 = vsyncadd [#allocation4], 96
      %s789 = sshll.u32 [#allocation7], 4
      %s790 = int_to_ptr.vmem [resolvable:$true] %s789
      %s791 = sshll.u32 %s3, 4
      %s792 = int_to_ptr.hbm [resolvable:$true] %s791
      %797 = dma.vmem_to_hbm [thread:$0]  %s790, 32, %s792, [#allocation4], 32, 32, 2
    $region25: #{tpu_custom_call.1} parent=1 // pred_fallthru
      _
    // Predicated region
    $region26: #{tpu_custom_call.1} parent=1 // pred_check
      _
    $region27: #{tpu_custom_call.1} parent=1 // pred_check_branch
      %799 = sbr.rel (0) target = $region29
    $region28: #{tpu_custom_call.1} parent=1 // pred_region
      %801 = dma.done [#allocation4], 128
    $region29: #{tpu_custom_call.1} parent=1 // pred_fallthru
      _
    %802 = vsyncpa [#allocation3], 1
    %803 = vsyncpa [#allocation6], 1
    %804 = vsyncpa [#allocation4], 1

</llo_original>
